<compile_context>
chip_gen: v7x
topology: tpu7x:2x2x1
jax: 0.10.0
libtpu: 0.0.40
codegen_flags: <defaults>
</compile_context>

<pallas_src>
import jax
import jax.numpy as jnp
from jax.experimental import pallas as pl
from jax.experimental.pallas import tpu as pltpu
import numpy as np


# ----------------------------- Pallas kernel --------------------------------

def dmvae_kernel(
    # data
    x1_ref, x2_ref,
    # packed reparameterization noise (5, B, E): z1, z2, z1_s, z2_s, z_s
    eps_ref,
    # encoder_x1: x1_dim -> hidden, then 4 head blocks hidden -> embed
    e1_w1_ref, e1_b1_ref, e1_w2h_ref, e1_b2h_ref,
    # encoder_x2
    e2_w1_ref, e2_b1_ref, e2_w2h_ref, e2_b2h_ref,
    # decoder_x1: 2*embed -> hidden -> x1_dim
    d1_w1_ref, d1_b1_ref, d1_w2_ref, d1_b2_ref,
    # decoder_x2
    d2_w1_ref, d2_b1_ref, d2_w2_ref, d2_b2_ref,
    # output: [loss, loss_recon, loss_kl, loss_recon_cross, loss_kl_cross]
    out_ref,
):
    f32 = jnp.float32
    x1 = x1_ref[...]
    x2 = x2_ref[...]
    B = x1.shape[0]
    X1 = x1.shape[1]
    X2 = x2.shape[1]
    E = eps_ref.shape[2]

    def encoder(x, w1_ref, b1_ref, w2h_ref, b2h_ref):
        h = jnp.dot(x, w1_ref[...], preferred_element_type=f32) + b1_ref[...]
        h = jnp.maximum(h, 0.0)  # relu
        # 4 lane-0-aligned heads (mu_s, logvar_s, mu, logvar), each (B, E).
        return tuple(
            jnp.dot(h, w2h_ref[k], preferred_element_type=f32) + b2h_ref[k]
            for k in range(4))

    mu_s1, lv_s1, mu_1, lv_1 = encoder(x1, e1_w1_ref, e1_b1_ref,
                                       e1_w2h_ref, e1_b2h_ref)
    mu_s2, lv_s2, mu_2, lv_2 = encoder(x2, e2_w1_ref, e2_b1_ref,
                                       e2_w2h_ref, e2_b2h_ref)

    # exp(logvar) computed once per head and reused by reparameterize / PoE / KL.
    var_1 = jnp.exp(lv_1)
    var_2 = jnp.exp(lv_2)
    var_s1 = jnp.exp(lv_s1)
    var_s2 = jnp.exp(lv_s2)

    # reparameterize (std = sqrt(var))
    z1 = mu_1 + eps_ref[0] * jnp.sqrt(var_1)
    z2 = mu_2 + eps_ref[1] * jnp.sqrt(var_2)
    z1_s = mu_s1 + eps_ref[2] * jnp.sqrt(var_s1)
    z2_s = mu_s2 + eps_ref[3] * jnp.sqrt(var_s2)

    # product of experts (reciprocal reuse, single log, no exp(logvar_s))
    inv1 = pl.reciprocal(var_s1, approx=False)
    inv2 = pl.reciprocal(var_s2, approx=False)
    prec = inv1 + inv2
    var_s = pl.reciprocal(prec, approx=False)
    lv_s = -jnp.log(prec)
    mu_s = var_s * (mu_s1 * inv1 + mu_s2 * inv2)
    z_s = mu_s + eps_ref[4] * jnp.sqrt(var_s)

    # ----- fused KL reductions (one sum per loss term) -----
    def kl_term(mu, lv, var):
        return 1.0 + lv - mu * mu - var

    kl_direct = (kl_term(mu_1, lv_1, var_1) + kl_term(mu_2, lv_2, var_2)
                 + 2.0 * kl_term(mu_s, lv_s, var_s))
    kl_cross = (kl_term(mu_1, lv_2, var_2) + kl_term(mu_2, lv_1, var_1)
                + kl_term(mu_s1, lv_s1, var_s1) + kl_term(mu_s2, lv_s2, var_s2))
    loss_kl = -0.5 * jnp.sum(kl_direct)
    loss_kl_cross = -0.5 * jnp.sum(kl_cross)

    # ----- decoders: batch-stack direct+cross, row-split W1 (no lane concat) --
    d1_w1a = d1_w1_ref[:E, :]     # rows multiplying the specific latent
    d1_w1b = d1_w1_ref[E:, :]     # rows multiplying the shared latent
    d2_w1a = d2_w1_ref[:E, :]
    d2_w1b = d2_w1_ref[E:, :]

    zd1 = jnp.concatenate([z1, z1], axis=0)        # (2B, E) sublane stack
    sd1 = jnp.concatenate([z_s, z2_s], axis=0)     # direct | cross shared part
    zd2 = jnp.concatenate([z2, z2], axis=0)
    sd2 = jnp.concatenate([z_s, z1_s], axis=0)

    h1 = jnp.maximum(
        jnp.dot(zd1, d1_w1a, preferred_element_type=f32)
        + jnp.dot(sd1, d1_w1b, preferred_element_type=f32)
        + d1_b1_ref[...], 0.0)
    rec1 = jnp.dot(h1, d1_w2_ref[...], preferred_element_type=f32) + d1_b2_ref[...]

    h2 = jnp.maximum(
        jnp.dot(zd2, d2_w1a, preferred_element_type=f32)
        + jnp.dot(sd2, d2_w1b, preferred_element_type=f32)
        + d2_b1_ref[...], 0.0)
    rec2 = jnp.dot(h2, d2_w2_ref[...], preferred_element_type=f32) + d2_b2_ref[...]

    # ----- MSE on stacked reconstructions (sublane-aligned halves) -----
    x1t = jnp.concatenate([x1, x1], axis=0)
    x2t = jnp.concatenate([x2, x2], axis=0)
    d1e = rec1 - x1t
    d2e = rec2 - x2t
    sq1 = d1e * d1e
    sq2 = d2e * d2e
    inv_n1 = 1.0 / float(B * X1)
    inv_n2 = 1.0 / float(B * X2)
    loss_recon = jnp.sum(sq1[:B]) * inv_n1 + jnp.sum(sq2[:B]) * inv_n2
    loss_recon_cross = jnp.sum(sq1[B:]) * inv_n1 + jnp.sum(sq2[B:]) * inv_n2

    a = 1.0  # self.a
    loss = loss_recon + a * loss_kl + loss_recon_cross + a * loss_kl_cross

    out_ref[0] = loss
    out_ref[1] = loss_recon
    out_ref[2] = loss_kl
    out_ref[3] = loss_recon_cross
    out_ref[4] = loss_kl_cross


# ------------------------------- wrapper -------------------------------------

def dmvae_forward(x1, x2, eps, params):
    """Returns a (5,) f32 array: [loss, recon, kl, recon_cross, kl_cross]."""
    B, E = eps[0].shape
    X1 = x1.shape[1]
    X2 = x2.shape[1]

    eps_stack = jnp.stack(eps)                     # (5, B, E): single input/DMA

    def split_heads(w2, b2):
        # (H, 4E) -> (4, H, E) column blocks; (1, 4E) -> (4, 1, E).
        e = w2.shape[1] // 4
        w2h = jnp.stack([w2[:, k * e:(k + 1) * e] for k in range(4)])
        b2h = jnp.stack([b2[:, k * e:(k + 1) * e] for k in range(4)])
        return w2h, b2h

    e1_w1, e1_b1, e1_w2, e1_b2 = params["enc1"]
    e2_w1, e2_b1, e2_w2, e2_b2 = params["enc2"]
    d1_w1, d1_b1, d1_w2, d1_b2 = params["dec1"]
    d2_w1, d2_b1, d2_w2, d2_b2 = params["dec2"]
    e1_w2h, e1_b2h = split_heads(e1_w2, e1_b2)
    e2_w2h, e2_b2h = split_heads(e2_w2, e2_b2)
    H = e1_w1.shape[1]

    args = (x1, x2, eps_stack,
            e1_w1, e1_b1, e1_w2h, e1_b2h,
            e2_w1, e2_b1, e2_w2h, e2_b2h,
            d1_w1, d1_b1, d1_w2, d1_b2,
            d2_w1, d2_b1, d2_w2, d2_b2)

    flops = int(
        2 * B * X1 * H + 2 * B * H * 4 * E            # encoder 1
        + 2 * B * X2 * H + 2 * B * H * 4 * E          # encoder 2
        + 2 * (2 * B) * (2 * E) * H + 2 * (2 * B) * H * X1   # decoder 1 (stacked)
        + 2 * (2 * B) * (2 * E) * H + 2 * (2 * B) * H * X2)  # decoder 2 (stacked)
    transcendentals = int(14 * B * E)                 # exp / log / sqrt / rcp
    bytes_accessed = int(sum(int(np.prod(a.shape)) for a in args) * 4 + 5 * 4)

    return pl.pallas_call(
        dmvae_kernel,
        out_shape=jax.ShapeDtypeStruct((5,), jnp.float32),
        out_specs=pl.BlockSpec(memory_space=pltpu.SMEM),
        cost_estimate=pl.CostEstimate(
            flops=flops,
            transcendentals=transcendentals,
            bytes_accessed=bytes_accessed),
    )(*args)


# ---------------------- parameter init (xavier uniform) ----------------------

def xavier_linear(key, fan_in, fan_out):
    bound = float(np.sqrt(6.0 / (fan_in + fan_out)))
    w = jax.random.uniform(key, (fan_in, fan_out), jnp.float32, -bound, bound)
    b = jnp.zeros((1, fan_out), jnp.float32)
    return w, b


def make_params(key, x1_dim, x2_dim, hidden_dim, embed_dim):
    ks = jax.random.split(key, 8)
    params = {}
    # mlp(in, hidden, out, layers=2) == Linear(in,hidden) -> ReLU -> Linear(hidden,out)
    for name, (din, dout), ka, kb in (
        ("enc1", (x1_dim, 4 * embed_dim), ks[0], ks[1]),
        ("enc2", (x2_dim, 4 * embed_dim), ks[2], ks[3]),
        ("dec1", (2 * embed_dim, x1_dim), ks[4], ks[5]),
        ("dec2", (2 * embed_dim, x2_dim), ks[6], ks[7]),
    ):
        w1, b1 = xavier_linear(ka, din, hidden_dim)
        w2, b2 = xavier_linear(kb, hidden_dim, dout)
        params[name] = (w1, b1, w2, b2)
    return params


# ------------------------ pure-JAX reference (check) --------------------------

def dmvae_reference(x1, x2, eps, params, a=1.0):
    def mlp2(x, p):
        w1, b1, w2, b2 = p
        return jnp.maximum(x @ w1 + b1, 0.0) @ w2 + b2

    emb1 = mlp2(x1, params["enc1"])
    emb2 = mlp2(x2, params["enc2"])
    mu_s1, lv_s1, mu_1, lv_1 = jnp.split(emb1, 4, axis=1)
    mu_s2, lv_s2, mu_2, lv_2 = jnp.split(emb2, 4, axis=1)
    rep = lambda mu, lv, e: mu + e * jnp.exp(0.5 * lv)
    z1, z2 = rep(mu_1, lv_1, eps[0]), rep(mu_2, lv_2, eps[1])
    z1_s, z2_s = rep(mu_s1, lv_s1, eps[2]), rep(mu_s2, lv_s2, eps[3])
    lv_s = -jnp.log(jnp.exp(-lv_s1) + jnp.exp(-lv_s2))
    mu_s = jnp.exp(lv_s) * (mu_s1 * jnp.exp(-lv_s1) + mu_s2 * jnp.exp(-lv_s2))
    z_s = rep(mu_s, lv_s, eps[4])
    kl = lambda mu, lv: -0.5 * jnp.sum(1 + lv - mu ** 2 - jnp.exp(lv))
    mse = lambda p, t: jnp.mean((p - t) ** 2)
    x1r = mlp2(jnp.concatenate([z1, z_s], 1), params["dec1"])
    x2r = mlp2(jnp.concatenate([z2, z_s], 1), params["dec2"])
    lr = mse(x1r, x1) + mse(x2r, x2)
    lk = kl(mu_1, lv_1) + kl(mu_2, lv_2) + 2 * kl(mu_s, lv_s)
    x1rc = mlp2(jnp.concatenate([z1, z2_s], 1), params["dec1"])
    x2rc = mlp2(jnp.concatenate([z2, z1_s], 1), params["dec2"])
    lrc = mse(x1rc, x1) + mse(x2rc, x2)
    lkc = kl(mu_1, lv_2) + kl(mu_2, lv_1) + kl(mu_s1, lv_s1) + kl(mu_s2, lv_s2)
    loss = lr + a * lk + lrc + a * lkc
    return jnp.stack([loss, lr, lk, lrc, lkc])


# ---------------------------------- main --------------------------------------

if __name__ == "__main__":
    B, X1, X2, H, E = 8, 16, 12, 32, 8

    key = jax.random.PRNGKey(0)
    k_x1, k_x2, k_p, *k_eps = jax.random.split(key, 8)

    x1 = jax.random.normal(k_x1, (B, X1), jnp.float32)
    x2 = jax.random.normal(k_x2, (B, X2), jnp.float32)
    eps = tuple(jax.random.normal(k, (B, E), jnp.float32) for k in k_eps)  # 5 noises
    params = make_params(k_p, X1, X2, H, E)

    out = jax.block_until_ready(dmvae_forward(x1, x2, eps, params))
    ref = jax.block_until_ready(dmvae_reference(x1, x2, eps, params))

    np.testing.assert_allclose(np.asarray(out), np.asarray(ref), rtol=2e-3, atol=2e-3)
    print("KERNEL_OK")
</pallas_src>

<mosaic_0001>
module attributes {stable_mosaic.version = 11 : i64} {
  func.func @dmvae_kernel(%arg0: memref<8x16xf32, #tpu.memory_space<vmem>>, %arg1: memref<8x12xf32, #tpu.memory_space<vmem>>, %arg2: memref<5x8x8xf32, #tpu.memory_space<vmem>>, %arg3: memref<16x32xf32, #tpu.memory_space<vmem>>, %arg4: memref<1x32xf32, #tpu.memory_space<vmem>>, %arg5: memref<4x32x8xf32, #tpu.memory_space<vmem>>, %arg6: memref<4x1x8xf32, #tpu.memory_space<vmem>>, %arg7: memref<12x32xf32, #tpu.memory_space<vmem>>, %arg8: memref<1x32xf32, #tpu.memory_space<vmem>>, %arg9: memref<4x32x8xf32, #tpu.memory_space<vmem>>, %arg10: memref<4x1x8xf32, #tpu.memory_space<vmem>>, %arg11: memref<16x32xf32, #tpu.memory_space<vmem>>, %arg12: memref<1x32xf32, #tpu.memory_space<vmem>>, %arg13: memref<32x16xf32, #tpu.memory_space<vmem>>, %arg14: memref<1x16xf32, #tpu.memory_space<vmem>>, %arg15: memref<16x32xf32, #tpu.memory_space<vmem>>, %arg16: memref<1x32xf32, #tpu.memory_space<vmem>>, %arg17: memref<32x12xf32, #tpu.memory_space<vmem>>, %arg18: memref<1x12xf32, #tpu.memory_space<vmem>>, %arg19: memref<5xf32, #tpu.memory_space<smem>>) attributes {dimension_semantics = [], scalar_prefetch = 0 : i64, scratch_operands = 0 : i64, tpu.core_type = #tpu.core_type<tc>} {
    %c0 = arith.constant 0 : index
    %c0_0 = arith.constant 0 : index
    %0 = vector.load %arg0[%c0, %c0_0] : memref<8x16xf32, #tpu.memory_space<vmem>>, vector<8x16xf32>
    %c0_1 = arith.constant 0 : index
    %c0_2 = arith.constant 0 : index
    %1 = vector.load %arg1[%c0_1, %c0_2] : memref<8x12xf32, #tpu.memory_space<vmem>>, vector<8x12xf32>
    %c0_3 = arith.constant 0 : index
    %c0_4 = arith.constant 0 : index
    %2 = vector.load %arg3[%c0_3, %c0_4] : memref<16x32xf32, #tpu.memory_space<vmem>>, vector<16x32xf32>
    %cst = arith.constant dense<0.000000e+00> : vector<8x32xf32>
    %3 = tpu.matmul %0, %2, %cst {dimension_numbers = #tpu.dot_dimension_numbers<[1], [0], [0], [1], [0, 0, 1, 1], [], []>} : vector<8x16xf32>, vector<16x32xf32>, vector<8x32xf32> -> vector<8x32xf32>
    %c0_5 = arith.constant 0 : index
    %c0_6 = arith.constant 0 : index
    %4 = vector.load %arg4[%c0_5, %c0_6] : memref<1x32xf32, #tpu.memory_space<vmem>>, vector<1x32xf32>
    %5 = vector.broadcast %4 : vector<1x32xf32> to vector<8x32xf32>
    %6 = arith.addf %3, %5 : vector<8x32xf32>
    %cst_7 = arith.constant 0.000000e+00 : f32
    %7 = vector.broadcast %cst_7 : f32 to vector<8x32xf32>
    %8 = arith.maximumf %6, %7 : vector<8x32xf32>
    %c0_8 = arith.constant 0 : index
    %c0_9 = arith.constant 0 : index
    %c0_10 = arith.constant 0 : index
    %9 = vector.load %arg5[%c0_8, %c0_9, %c0_10] : memref<4x32x8xf32, #tpu.memory_space<vmem>>, vector<1x32x8xf32>
    %10 = vector.shape_cast %9 : vector<1x32x8xf32> to vector<32x8xf32>
    %cst_11 = arith.constant dense<0.000000e+00> : vector<8x8xf32>
    %11 = tpu.matmul %8, %10, %cst_11 {dimension_numbers = #tpu.dot_dimension_numbers<[1], [0], [0], [1], [0, 0, 1, 1], [], []>} : vector<8x32xf32>, vector<32x8xf32>, vector<8x8xf32> -> vector<8x8xf32>
    %c0_12 = arith.constant 0 : index
    %c0_13 = arith.constant 0 : index
    %c0_14 = arith.constant 0 : index
    %12 = vector.load %arg6[%c0_12, %c0_13, %c0_14] : memref<4x1x8xf32, #tpu.memory_space<vmem>>, vector<1x1x8xf32>
    %13 = vector.shape_cast %12 : vector<1x1x8xf32> to vector<1x8xf32>
    %14 = vector.broadcast %13 : vector<1x8xf32> to vector<8x8xf32>
    %15 = arith.addf %11, %14 : vector<8x8xf32>
    %c1 = arith.constant 1 : index
    %c0_15 = arith.constant 0 : index
    %c0_16 = arith.constant 0 : index
    %16 = vector.load %arg5[%c1, %c0_15, %c0_16] : memref<4x32x8xf32, #tpu.memory_space<vmem>>, vector<1x32x8xf32>
    %17 = vector.shape_cast %16 : vector<1x32x8xf32> to vector<32x8xf32>
    %cst_17 = arith.constant dense<0.000000e+00> : vector<8x8xf32>
    %18 = tpu.matmul %8, %17, %cst_17 {dimension_numbers = #tpu.dot_dimension_numbers<[1], [0], [0], [1], [0, 0, 1, 1], [], []>} : vector<8x32xf32>, vector<32x8xf32>, vector<8x8xf32> -> vector<8x8xf32>
    %c1_18 = arith.constant 1 : index
    %c0_19 = arith.constant 0 : index
    %c0_20 = arith.constant 0 : index
    %19 = vector.load %arg6[%c1_18, %c0_19, %c0_20] : memref<4x1x8xf32, #tpu.memory_space<vmem>>, vector<1x1x8xf32>
    %20 = vector.shape_cast %19 : vector<1x1x8xf32> to vector<1x8xf32>
    %21 = vector.broadcast %20 : vector<1x8xf32> to vector<8x8xf32>
    %22 = arith.addf %18, %21 : vector<8x8xf32>
    %c2 = arith.constant 2 : index
    %c0_21 = arith.constant 0 : index
    %c0_22 = arith.constant 0 : index
    %23 = vector.load %arg5[%c2, %c0_21, %c0_22] : memref<4x32x8xf32, #tpu.memory_space<vmem>>, vector<1x32x8xf32>
    %24 = vector.shape_cast %23 : vector<1x32x8xf32> to vector<32x8xf32>
    %cst_23 = arith.constant dense<0.000000e+00> : vector<8x8xf32>
    %25 = tpu.matmul %8, %24, %cst_23 {dimension_numbers = #tpu.dot_dimension_numbers<[1], [0], [0], [1], [0, 0, 1, 1], [], []>} : vector<8x32xf32>, vector<32x8xf32>, vector<8x8xf32> -> vector<8x8xf32>
    %c2_24 = arith.constant 2 : index
    %c0_25 = arith.constant 0 : index
    %c0_26 = arith.constant 0 : index
    %26 = vector.load %arg6[%c2_24, %c0_25, %c0_26] : memref<4x1x8xf32, #tpu.memory_space<vmem>>, vector<1x1x8xf32>
    %27 = vector.shape_cast %26 : vector<1x1x8xf32> to vector<1x8xf32>
    %28 = vector.broadcast %27 : vector<1x8xf32> to vector<8x8xf32>
    %29 = arith.addf %25, %28 : vector<8x8xf32>
    %c3 = arith.constant 3 : index
    %c0_27 = arith.constant 0 : index
    %c0_28 = arith.constant 0 : index
    %30 = vector.load %arg5[%c3, %c0_27, %c0_28] : memref<4x32x8xf32, #tpu.memory_space<vmem>>, vector<1x32x8xf32>
    %31 = vector.shape_cast %30 : vector<1x32x8xf32> to vector<32x8xf32>
    %cst_29 = arith.constant dense<0.000000e+00> : vector<8x8xf32>
    %32 = tpu.matmul %8, %31, %cst_29 {dimension_numbers = #tpu.dot_dimension_numbers<[1], [0], [0], [1], [0, 0, 1, 1], [], []>} : vector<8x32xf32>, vector<32x8xf32>, vector<8x8xf32> -> vector<8x8xf32>
    %c3_30 = arith.constant 3 : index
    %c0_31 = arith.constant 0 : index
    %c0_32 = arith.constant 0 : index
    %33 = vector.load %arg6[%c3_30, %c0_31, %c0_32] : memref<4x1x8xf32, #tpu.memory_space<vmem>>, vector<1x1x8xf32>
    %34 = vector.shape_cast %33 : vector<1x1x8xf32> to vector<1x8xf32>
    %35 = vector.broadcast %34 : vector<1x8xf32> to vector<8x8xf32>
    %36 = arith.addf %32, %35 : vector<8x8xf32>
    %c0_33 = arith.constant 0 : index
    %c0_34 = arith.constant 0 : index
    %37 = vector.load %arg7[%c0_33, %c0_34] : memref<12x32xf32, #tpu.memory_space<vmem>>, vector<12x32xf32>
    %cst_35 = arith.constant dense<0.000000e+00> : vector<8x32xf32>
    %38 = tpu.matmul %1, %37, %cst_35 {dimension_numbers = #tpu.dot_dimension_numbers<[1], [0], [0], [1], [0, 0, 1, 1], [], []>} : vector<8x12xf32>, vector<12x32xf32>, vector<8x32xf32> -> vector<8x32xf32>
    %c0_36 = arith.constant 0 : index
    %c0_37 = arith.constant 0 : index
    %39 = vector.load %arg8[%c0_36, %c0_37] : memref<1x32xf32, #tpu.memory_space<vmem>>, vector<1x32xf32>
    %40 = vector.broadcast %39 : vector<1x32xf32> to vector<8x32xf32>
    %41 = arith.addf %38, %40 : vector<8x32xf32>
    %cst_38 = arith.constant 0.000000e+00 : f32
    %42 = vector.broadcast %cst_38 : f32 to vector<8x32xf32>
    %43 = arith.maximumf %41, %42 : vector<8x32xf32>
    %c0_39 = arith.constant 0 : index
    %c0_40 = arith.constant 0 : index
    %c0_41 = arith.constant 0 : index
    %44 = vector.load %arg9[%c0_39, %c0_40, %c0_41] : memref<4x32x8xf32, #tpu.memory_space<vmem>>, vector<1x32x8xf32>
    %45 = vector.shape_cast %44 : vector<1x32x8xf32> to vector<32x8xf32>
    %cst_42 = arith.constant dense<0.000000e+00> : vector<8x8xf32>
    %46 = tpu.matmul %43, %45, %cst_42 {dimension_numbers = #tpu.dot_dimension_numbers<[1], [0], [0], [1], [0, 0, 1, 1], [], []>} : vector<8x32xf32>, vector<32x8xf32>, vector<8x8xf32> -> vector<8x8xf32>
    %c0_43 = arith.constant 0 : index
    %c0_44 = arith.constant 0 : index
    %c0_45 = arith.constant 0 : index
    %47 = vector.load %arg10[%c0_43, %c0_44, %c0_45] : memref<4x1x8xf32, #tpu.memory_space<vmem>>, vector<1x1x8xf32>
    %48 = vector.shape_cast %47 : vector<1x1x8xf32> to vector<1x8xf32>
    %49 = vector.broadcast %48 : vector<1x8xf32> to vector<8x8xf32>
    %50 = arith.addf %46, %49 : vector<8x8xf32>
    %c1_46 = arith.constant 1 : index
    %c0_47 = arith.constant 0 : index
    %c0_48 = arith.constant 0 : index
    %51 = vector.load %arg9[%c1_46, %c0_47, %c0_48] : memref<4x32x8xf32, #tpu.memory_space<vmem>>, vector<1x32x8xf32>
    %52 = vector.shape_cast %51 : vector<1x32x8xf32> to vector<32x8xf32>
    %cst_49 = arith.constant dense<0.000000e+00> : vector<8x8xf32>
    %53 = tpu.matmul %43, %52, %cst_49 {dimension_numbers = #tpu.dot_dimension_numbers<[1], [0], [0], [1], [0, 0, 1, 1], [], []>} : vector<8x32xf32>, vector<32x8xf32>, vector<8x8xf32> -> vector<8x8xf32>
    %c1_50 = arith.constant 1 : index
    %c0_51 = arith.constant 0 : index
    %c0_52 = arith.constant 0 : index
    %54 = vector.load %arg10[%c1_50, %c0_51, %c0_52] : memref<4x1x8xf32, #tpu.memory_space<vmem>>, vector<1x1x8xf32>
    %55 = vector.shape_cast %54 : vector<1x1x8xf32> to vector<1x8xf32>
    %56 = vector.broadcast %55 : vector<1x8xf32> to vector<8x8xf32>
    %57 = arith.addf %53, %56 : vector<8x8xf32>
    %c2_53 = arith.constant 2 : index
    %c0_54 = arith.constant 0 : index
    %c0_55 = arith.constant 0 : index
    %58 = vector.load %arg9[%c2_53, %c0_54, %c0_55] : memref<4x32x8xf32, #tpu.memory_space<vmem>>, vector<1x32x8xf32>
    %59 = vector.shape_cast %58 : vector<1x32x8xf32> to vector<32x8xf32>
    %cst_56 = arith.constant dense<0.000000e+00> : vector<8x8xf32>
    %60 = tpu.matmul %43, %59, %cst_56 {dimension_numbers = #tpu.dot_dimension_numbers<[1], [0], [0], [1], [0, 0, 1, 1], [], []>} : vector<8x32xf32>, vector<32x8xf32>, vector<8x8xf32> -> vector<8x8xf32>
    %c2_57 = arith.constant 2 : index
    %c0_58 = arith.constant 0 : index
    %c0_59 = arith.constant 0 : index
    %61 = vector.load %arg10[%c2_57, %c0_58, %c0_59] : memref<4x1x8xf32, #tpu.memory_space<vmem>>, vector<1x1x8xf32>
    %62 = vector.shape_cast %61 : vector<1x1x8xf32> to vector<1x8xf32>
    %63 = vector.broadcast %62 : vector<1x8xf32> to vector<8x8xf32>
    %64 = arith.addf %60, %63 : vector<8x8xf32>
    %c3_60 = arith.constant 3 : index
    %c0_61 = arith.constant 0 : index
    %c0_62 = arith.constant 0 : index
    %65 = vector.load %arg9[%c3_60, %c0_61, %c0_62] : memref<4x32x8xf32, #tpu.memory_space<vmem>>, vector<1x32x8xf32>
    %66 = vector.shape_cast %65 : vector<1x32x8xf32> to vector<32x8xf32>
    %cst_63 = arith.constant dense<0.000000e+00> : vector<8x8xf32>
    %67 = tpu.matmul %43, %66, %cst_63 {dimension_numbers = #tpu.dot_dimension_numbers<[1], [0], [0], [1], [0, 0, 1, 1], [], []>} : vector<8x32xf32>, vector<32x8xf32>, vector<8x8xf32> -> vector<8x8xf32>
    %c3_64 = arith.constant 3 : index
    %c0_65 = arith.constant 0 : index
    %c0_66 = arith.constant 0 : index
    %68 = vector.load %arg10[%c3_64, %c0_65, %c0_66] : memref<4x1x8xf32, #tpu.memory_space<vmem>>, vector<1x1x8xf32>
    %69 = vector.shape_cast %68 : vector<1x1x8xf32> to vector<1x8xf32>
    %70 = vector.broadcast %69 : vector<1x8xf32> to vector<8x8xf32>
    %71 = arith.addf %67, %70 : vector<8x8xf32>
    %72 = math.exp %36 : vector<8x8xf32>
    %73 = math.exp %71 : vector<8x8xf32>
    %74 = math.exp %22 : vector<8x8xf32>
    %75 = math.exp %57 : vector<8x8xf32>
    %c0_67 = arith.constant 0 : index
    %c0_68 = arith.constant 0 : index
    %c0_69 = arith.constant 0 : index
    %76 = vector.load %arg2[%c0_67, %c0_68, %c0_69] : memref<5x8x8xf32, #tpu.memory_space<vmem>>, vector<1x8x8xf32>
    %77 = vector.shape_cast %76 : vector<1x8x8xf32> to vector<8x8xf32>
    %78 = math.sqrt %72 : vector<8x8xf32>
    %79 = arith.mulf %77, %78 : vector<8x8xf32>
    %80 = arith.addf %29, %79 : vector<8x8xf32>
    %c1_70 = arith.constant 1 : index
    %c0_71 = arith.constant 0 : index
    %c0_72 = arith.constant 0 : index
    %81 = vector.load %arg2[%c1_70, %c0_71, %c0_72] : memref<5x8x8xf32, #tpu.memory_space<vmem>>, vector<1x8x8xf32>
    %82 = vector.shape_cast %81 : vector<1x8x8xf32> to vector<8x8xf32>
    %83 = math.sqrt %73 : vector<8x8xf32>
    %84 = arith.mulf %82, %83 : vector<8x8xf32>
    %85 = arith.addf %64, %84 : vector<8x8xf32>
    %c2_73 = arith.constant 2 : index
    %c0_74 = arith.constant 0 : index
    %c0_75 = arith.constant 0 : index
    %86 = vector.load %arg2[%c2_73, %c0_74, %c0_75] : memref<5x8x8xf32, #tpu.memory_space<vmem>>, vector<1x8x8xf32>
    %87 = vector.shape_cast %86 : vector<1x8x8xf32> to vector<8x8xf32>
    %88 = math.sqrt %74 : vector<8x8xf32>
    %89 = arith.mulf %87, %88 : vector<8x8xf32>
    %90 = arith.addf %15, %89 : vector<8x8xf32>
    %c3_76 = arith.constant 3 : index
    %c0_77 = arith.constant 0 : index
    %c0_78 = arith.constant 0 : index
    %91 = vector.load %arg2[%c3_76, %c0_77, %c0_78] : memref<5x8x8xf32, #tpu.memory_space<vmem>>, vector<1x8x8xf32>
    %92 = vector.shape_cast %91 : vector<1x8x8xf32> to vector<8x8xf32>
    %93 = math.sqrt %75 : vector<8x8xf32>
    %94 = arith.mulf %92, %93 : vector<8x8xf32>
    %95 = arith.addf %50, %94 : vector<8x8xf32>
    %96 = tpu.reciprocal %74 : vector<8x8xf32> -> vector<8x8xf32>
    %97 = tpu.reciprocal %75 : vector<8x8xf32> -> vector<8x8xf32>
    %98 = arith.addf %96, %97 : vector<8x8xf32>
    %99 = tpu.reciprocal %98 : vector<8x8xf32> -> vector<8x8xf32>
    %100 = math.log %98 : vector<8x8xf32>
    %cst_79 = arith.constant 0.000000e+00 : f32
    %101 = vector.broadcast %cst_79 : f32 to vector<8x8xf32>
    %102 = arith.subf %101, %100 : vector<8x8xf32>
    %103 = arith.mulf %15, %96 : vector<8x8xf32>
    %104 = arith.mulf %50, %97 : vector<8x8xf32>
    %105 = arith.addf %103, %104 : vector<8x8xf32>
    %106 = arith.mulf %99, %105 : vector<8x8xf32>
    %c4 = arith.constant 4 : index
    %c0_80 = arith.constant 0 : index
    %c0_81 = arith.constant 0 : index
    %107 = vector.load %arg2[%c4, %c0_80, %c0_81] : memref<5x8x8xf32, #tpu.memory_space<vmem>>, vector<1x8x8xf32>
    %108 = vector.shape_cast %107 : vector<1x8x8xf32> to vector<8x8xf32>
    %109 = math.sqrt %99 : vector<8x8xf32>
    %110 = arith.mulf %108, %109 : vector<8x8xf32>
    %111 = arith.addf %106, %110 : vector<8x8xf32>
    %cst_82 = arith.constant 1.000000e+00 : f32
    %112 = vector.broadcast %cst_82 : f32 to vector<8x8xf32>
    %113 = arith.addf %112, %36 : vector<8x8xf32>
    %114 = arith.mulf %29, %29 : vector<8x8xf32>
    %115 = arith.subf %113, %114 : vector<8x8xf32>
    %116 = arith.subf %115, %72 : vector<8x8xf32>
    %cst_83 = arith.constant 1.000000e+00 : f32
    %117 = vector.broadcast %cst_83 : f32 to vector<8x8xf32>
    %118 = arith.addf %117, %71 : vector<8x8xf32>
    %119 = arith.mulf %64, %64 : vector<8x8xf32>
    %120 = arith.subf %118, %119 : vector<8x8xf32>
    %121 = arith.subf %120, %73 : vector<8x8xf32>
    %122 = arith.addf %116, %121 : vector<8x8xf32>
    %cst_84 = arith.constant 1.000000e+00 : f32
    %123 = vector.broadcast %cst_84 : f32 to vector<8x8xf32>
    %124 = arith.addf %123, %102 : vector<8x8xf32>
    %125 = arith.mulf %106, %106 : vector<8x8xf32>
    %126 = arith.subf %124, %125 : vector<8x8xf32>
    %127 = arith.subf %126, %99 : vector<8x8xf32>
    %cst_85 = arith.constant 2.000000e+00 : f32
    %128 = vector.broadcast %cst_85 : f32 to vector<8x8xf32>
    %129 = arith.mulf %128, %127 : vector<8x8xf32>
    %130 = arith.addf %122, %129 : vector<8x8xf32>
    %cst_86 = arith.constant 1.000000e+00 : f32
    %131 = vector.broadcast %cst_86 : f32 to vector<8x8xf32>
    %132 = arith.addf %131, %71 : vector<8x8xf32>
    %133 = arith.mulf %29, %29 : vector<8x8xf32>
    %134 = arith.subf %132, %133 : vector<8x8xf32>
    %135 = arith.subf %134, %73 : vector<8x8xf32>
    %cst_87 = arith.constant 1.000000e+00 : f32
    %136 = vector.broadcast %cst_87 : f32 to vector<8x8xf32>
    %137 = arith.addf %136, %36 : vector<8x8xf32>
    %138 = arith.mulf %64, %64 : vector<8x8xf32>
    %139 = arith.subf %137, %138 : vector<8x8xf32>
    %140 = arith.subf %139, %72 : vector<8x8xf32>
    %141 = arith.addf %135, %140 : vector<8x8xf32>
    %cst_88 = arith.constant 1.000000e+00 : f32
    %142 = vector.broadcast %cst_88 : f32 to vector<8x8xf32>
    %143 = arith.addf %142, %22 : vector<8x8xf32>
    %144 = arith.mulf %15, %15 : vector<8x8xf32>
    %145 = arith.subf %143, %144 : vector<8x8xf32>
    %146 = arith.subf %145, %74 : vector<8x8xf32>
    %147 = arith.addf %141, %146 : vector<8x8xf32>
    %cst_89 = arith.constant 1.000000e+00 : f32
    %148 = vector.broadcast %cst_89 : f32 to vector<8x8xf32>
    %149 = arith.addf %148, %57 : vector<8x8xf32>
    %150 = arith.mulf %50, %50 : vector<8x8xf32>
    %151 = arith.subf %149, %150 : vector<8x8xf32>
    %152 = arith.subf %151, %75 : vector<8x8xf32>
    %153 = arith.addf %147, %152 : vector<8x8xf32>
    %154 = vector.shape_cast %130 : vector<8x8xf32> to vector<1x8x8xf32>
    %cst_90 = arith.constant dense<0.000000e+00> : vector<1xf32>
    %155 = vector.multi_reduction <add>, %154, %cst_90 [1, 2] : vector<1x8x8xf32> to vector<1xf32>
    %156 = vector.shape_cast %155 : vector<1xf32> to vector<1x1x1xf32>
    %157 = vector.extract %156[0, 0, 0] : f32 from vector<1x1x1xf32>
    %cst_91 = arith.constant -5.000000e-01 : f32
    %158 = arith.mulf %cst_91, %157 : f32
    %159 = vector.shape_cast %153 : vector<8x8xf32> to vector<1x8x8xf32>
    %cst_92 = arith.constant dense<0.000000e+00> : vector<1xf32>
    %160 = vector.multi_reduction <add>, %159, %cst_92 [1, 2] : vector<1x8x8xf32> to vector<1xf32>
    %161 = vector.shape_cast %160 : vector<1xf32> to vector<1x1x1xf32>
    %162 = vector.extract %161[0, 0, 0] : f32 from vector<1x1x1xf32>
    %cst_93 = arith.constant -5.000000e-01 : f32
    %163 = arith.mulf %cst_93, %162 : f32
    %c0_94 = arith.constant 0 : index
    %c0_95 = arith.constant 0 : index
    %164 = vector.load %arg11[%c0_94, %c0_95] : memref<16x32xf32, #tpu.memory_space<vmem>>, vector<8x32xf32>
    %c8 = arith.constant 8 : index
    %c0_96 = arith.constant 0 : index
    %165 = vector.load %arg11[%c8, %c0_96] : memref<16x32xf32, #tpu.memory_space<vmem>>, vector<8x32xf32>
    %c0_97 = arith.constant 0 : index
    %c0_98 = arith.constant 0 : index
    %166 = vector.load %arg15[%c0_97, %c0_98] : memref<16x32xf32, #tpu.memory_space<vmem>>, vector<8x32xf32>
    %c8_99 = arith.constant 8 : index
    %c0_100 = arith.constant 0 : index
    %167 = vector.load %arg15[%c8_99, %c0_100] : memref<16x32xf32, #tpu.memory_space<vmem>>, vector<8x32xf32>
    %168 = tpu.concatenate %80, %80 in 0 : vector<8x8xf32>, vector<8x8xf32> -> vector<16x8xf32>
    %169 = tpu.concatenate %111, %95 in 0 : vector<8x8xf32>, vector<8x8xf32> -> vector<16x8xf32>
    %170 = tpu.concatenate %85, %85 in 0 : vector<8x8xf32>, vector<8x8xf32> -> vector<16x8xf32>
    %171 = tpu.concatenate %111, %90 in 0 : vector<8x8xf32>, vector<8x8xf32> -> vector<16x8xf32>
    %cst_101 = arith.constant dense<0.000000e+00> : vector<16x32xf32>
    %172 = tpu.matmul %168, %164, %cst_101 {dimension_numbers = #tpu.dot_dimension_numbers<[1], [0], [0], [1], [0, 0, 1, 1], [], []>} : vector<16x8xf32>, vector<8x32xf32>, vector<16x32xf32> -> vector<16x32xf32>
    %cst_102 = arith.constant dense<0.000000e+00> : vector<16x32xf32>
    %173 = tpu.matmul %169, %165, %cst_102 {dimension_numbers = #tpu.dot_dimension_numbers<[1], [0], [0], [1], [0, 0, 1, 1], [], []>} : vector<16x8xf32>, vector<8x32xf32>, vector<16x32xf32> -> vector<16x32xf32>
    %174 = arith.addf %172, %173 : vector<16x32xf32>
    %c0_103 = arith.constant 0 : index
    %c0_104 = arith.constant 0 : index
    %175 = vector.load %arg12[%c0_103, %c0_104] : memref<1x32xf32, #tpu.memory_space<vmem>>, vector<1x32xf32>
    %176 = vector.broadcast %175 : vector<1x32xf32> to vector<16x32xf32>
    %177 = arith.addf %174, %176 : vector<16x32xf32>
    %cst_105 = arith.constant 0.000000e+00 : f32
    %178 = vector.broadcast %cst_105 : f32 to vector<16x32xf32>
    %179 = arith.maximumf %177, %178 : vector<16x32xf32>
    %c0_106 = arith.constant 0 : index
    %c0_107 = arith.constant 0 : index
    %180 = vector.load %arg13[%c0_106, %c0_107] : memref<32x16xf32, #tpu.memory_space<vmem>>, vector<32x16xf32>
    %cst_108 = arith.constant dense<0.000000e+00> : vector<16x16xf32>
    %181 = tpu.matmul %179, %180, %cst_108 {dimension_numbers = #tpu.dot_dimension_numbers<[1], [0], [0], [1], [0, 0, 1, 1], [], []>} : vector<16x32xf32>, vector<32x16xf32>, vector<16x16xf32> -> vector<16x16xf32>
    %c0_109 = arith.constant 0 : index
    %c0_110 = arith.constant 0 : index
    %182 = vector.load %arg14[%c0_109, %c0_110] : memref<1x16xf32, #tpu.memory_space<vmem>>, vector<1x16xf32>
    %183 = vector.broadcast %182 : vector<1x16xf32> to vector<16x16xf32>
    %184 = arith.addf %181, %183 : vector<16x16xf32>
    %cst_111 = arith.constant dense<0.000000e+00> : vector<16x32xf32>
    %185 = tpu.matmul %170, %166, %cst_111 {dimension_numbers = #tpu.dot_dimension_numbers<[1], [0], [0], [1], [0, 0, 1, 1], [], []>} : vector<16x8xf32>, vector<8x32xf32>, vector<16x32xf32> -> vector<16x32xf32>
    %cst_112 = arith.constant dense<0.000000e+00> : vector<16x32xf32>
    %186 = tpu.matmul %171, %167, %cst_112 {dimension_numbers = #tpu.dot_dimension_numbers<[1], [0], [0], [1], [0, 0, 1, 1], [], []>} : vector<16x8xf32>, vector<8x32xf32>, vector<16x32xf32> -> vector<16x32xf32>
    %187 = arith.addf %185, %186 : vector<16x32xf32>
    %c0_113 = arith.constant 0 : index
    %c0_114 = arith.constant 0 : index
    %188 = vector.load %arg16[%c0_113, %c0_114] : memref<1x32xf32, #tpu.memory_space<vmem>>, vector<1x32xf32>
    %189 = vector.broadcast %188 : vector<1x32xf32> to vector<16x32xf32>
    %190 = arith.addf %187, %189 : vector<16x32xf32>
    %cst_115 = arith.constant 0.000000e+00 : f32
    %191 = vector.broadcast %cst_115 : f32 to vector<16x32xf32>
    %192 = arith.maximumf %190, %191 : vector<16x32xf32>
    %c0_116 = arith.constant 0 : index
    %c0_117 = arith.constant 0 : index
    %193 = vector.load %arg17[%c0_116, %c0_117] : memref<32x12xf32, #tpu.memory_space<vmem>>, vector<32x12xf32>
    %cst_118 = arith.constant dense<0.000000e+00> : vector<16x12xf32>
    %194 = tpu.matmul %192, %193, %cst_118 {dimension_numbers = #tpu.dot_dimension_numbers<[1], [0], [0], [1], [0, 0, 1, 1], [], []>} : vector<16x32xf32>, vector<32x12xf32>, vector<16x12xf32> -> vector<16x12xf32>
    %c0_119 = arith.constant 0 : index
    %c0_120 = arith.constant 0 : index
    %195 = vector.load %arg18[%c0_119, %c0_120] : memref<1x12xf32, #tpu.memory_space<vmem>>, vector<1x12xf32>
    %196 = vector.broadcast %195 : vector<1x12xf32> to vector<16x12xf32>
    %197 = arith.addf %194, %196 : vector<16x12xf32>
    %198 = tpu.concatenate %0, %0 in 0 : vector<8x16xf32>, vector<8x16xf32> -> vector<16x16xf32>
    %199 = tpu.concatenate %1, %1 in 0 : vector<8x12xf32>, vector<8x12xf32> -> vector<16x12xf32>
    %200 = arith.subf %184, %198 : vector<16x16xf32>
    %201 = arith.subf %197, %199 : vector<16x12xf32>
    %202 = arith.mulf %200, %200 : vector<16x16xf32>
    %203 = arith.mulf %201, %201 : vector<16x12xf32>
    %204 = vector.extract_strided_slice %202 {offsets = [0, 0], sizes = [8, 16], strides = [1, 1]} : vector<16x16xf32> to vector<8x16xf32>
    %205 = vector.shape_cast %204 : vector<8x16xf32> to vector<1x8x16xf32>
    %cst_121 = arith.constant dense<0.000000e+00> : vector<1xf32>
    %206 = vector.multi_reduction <add>, %205, %cst_121 [1, 2] : vector<1x8x16xf32> to vector<1xf32>
    %207 = vector.shape_cast %206 : vector<1xf32> to vector<1x1x1xf32>
    %208 = vector.extract %207[0, 0, 0] : f32 from vector<1x1x1xf32>
    %cst_122 = arith.constant 7.812500e-03 : f32
    %209 = arith.mulf %208, %cst_122 : f32
    %210 = vector.extract_strided_slice %203 {offsets = [0, 0], sizes = [8, 12], strides = [1, 1]} : vector<16x12xf32> to vector<8x12xf32>
    %211 = vector.shape_cast %210 : vector<8x12xf32> to vector<1x8x12xf32>
    %cst_123 = arith.constant dense<0.000000e+00> : vector<1xf32>
    %212 = vector.multi_reduction <add>, %211, %cst_123 [1, 2] : vector<1x8x12xf32> to vector<1xf32>
    %213 = vector.shape_cast %212 : vector<1xf32> to vector<1x1x1xf32>
    %214 = vector.extract %213[0, 0, 0] : f32 from vector<1x1x1xf32>
    %cst_124 = arith.constant 0.010416667 : f32
    %215 = arith.mulf %214, %cst_124 : f32
    %216 = arith.addf %209, %215 : f32
    %217 = vector.extract_strided_slice %202 {offsets = [8, 0], sizes = [8, 16], strides = [1, 1]} : vector<16x16xf32> to vector<8x16xf32>
    %218 = vector.shape_cast %217 : vector<8x16xf32> to vector<1x8x16xf32>
    %cst_125 = arith.constant dense<0.000000e+00> : vector<1xf32>
    %219 = vector.multi_reduction <add>, %218, %cst_125 [1, 2] : vector<1x8x16xf32> to vector<1xf32>
    %220 = vector.shape_cast %219 : vector<1xf32> to vector<1x1x1xf32>
    %221 = vector.extract %220[0, 0, 0] : f32 from vector<1x1x1xf32>
    %cst_126 = arith.constant 7.812500e-03 : f32
    %222 = arith.mulf %221, %cst_126 : f32
    %223 = vector.extract_strided_slice %203 {offsets = [8, 0], sizes = [8, 12], strides = [1, 1]} : vector<16x12xf32> to vector<8x12xf32>
    %224 = vector.shape_cast %223 : vector<8x12xf32> to vector<1x8x12xf32>
    %cst_127 = arith.constant dense<0.000000e+00> : vector<1xf32>
    %225 = vector.multi_reduction <add>, %224, %cst_127 [1, 2] : vector<1x8x12xf32> to vector<1xf32>
    %226 = vector.shape_cast %225 : vector<1xf32> to vector<1x1x1xf32>
    %227 = vector.extract %226[0, 0, 0] : f32 from vector<1x1x1xf32>
    %cst_128 = arith.constant 0.010416667 : f32
    %228 = arith.mulf %227, %cst_128 : f32
    %229 = arith.addf %222, %228 : f32
    %cst_129 = arith.constant 1.000000e+00 : f32
    %230 = arith.mulf %cst_129, %158 : f32
    %231 = arith.addf %216, %230 : f32
    %232 = arith.addf %231, %229 : f32
    %cst_130 = arith.constant 1.000000e+00 : f32
    %233 = arith.mulf %cst_130, %163 : f32
    %234 = arith.addf %232, %233 : f32
    %c0_131 = arith.constant 0 : index
    %235 = memref.load %arg19[%c0_131] : memref<5xf32, #tpu.memory_space<smem>>
    memref.store %234, %arg19[%c0_131] : memref<5xf32, #tpu.memory_space<smem>>
    %c1_132 = arith.constant 1 : index
    %236 = memref.load %arg19[%c1_132] : memref<5xf32, #tpu.memory_space<smem>>
    memref.store %216, %arg19[%c1_132] : memref<5xf32, #tpu.memory_space<smem>>
    %c2_133 = arith.constant 2 : index
    %237 = memref.load %arg19[%c2_133] : memref<5xf32, #tpu.memory_space<smem>>
    memref.store %158, %arg19[%c2_133] : memref<5xf32, #tpu.memory_space<smem>>
    %c3_134 = arith.constant 3 : index
    %238 = memref.load %arg19[%c3_134] : memref<5xf32, #tpu.memory_space<smem>>
    memref.store %229, %arg19[%c3_134] : memref<5xf32, #tpu.memory_space<smem>>
    %c4_135 = arith.constant 4 : index
    %239 = memref.load %arg19[%c4_135] : memref<5xf32, #tpu.memory_space<smem>>
    memref.store %163, %arg19[%c4_135] : memref<5xf32, #tpu.memory_space<smem>>
    return
  }
}

</mosaic_0001>

<llo_original>
// kernel: tpu_custom_call.1
$region0: #{tpu_custom_call.1}
  #allocation0 [shape = 'u32[]', space=smem, size = 0x4, offset = 0x4, fixed_abs, tag = 'smem constant byte address 0x4 - core index']
  #allocation1 [shape = 'u32[144,128]{1,0:T(1,128)}', space=vmem, size = 0x12000, scoped, tag = 'internal scratch']
  %s0 = inlined_call_operand.vmem [shape: f32[8,16], index: 0, kind: input, shape index: {}]
  %s1 = inlined_call_operand.vmem [shape: f32[8,12], index: 1, kind: input, shape index: {}]
  %s2 = inlined_call_operand.vmem [shape: f32[5,8,8], index: 2, kind: input, shape index: {}]
  %s3 = inlined_call_operand.vmem [shape: f32[16,32], index: 3, kind: input, shape index: {}]
  %s4 = inlined_call_operand.vmem [shape: f32[1,32], index: 4, kind: input, shape index: {}]
  %s5 = inlined_call_operand.vmem [shape: f32[4,32,8], index: 5, kind: input, shape index: {}]
  %s6 = inlined_call_operand.vmem [shape: f32[4,1,8], index: 6, kind: input, shape index: {}]
  %s7 = inlined_call_operand.vmem [shape: f32[12,32], index: 7, kind: input, shape index: {}]
  %s8 = inlined_call_operand.vmem [shape: f32[1,32], index: 8, kind: input, shape index: {}]
  %s9 = inlined_call_operand.vmem [shape: f32[4,32,8], index: 9, kind: input, shape index: {}]
  %s10 = inlined_call_operand.vmem [shape: f32[4,1,8], index: 10, kind: input, shape index: {}]
  %s11 = inlined_call_operand.vmem [shape: f32[16,32], index: 11, kind: input, shape index: {}]
  %s12 = inlined_call_operand.vmem [shape: f32[1,32], index: 12, kind: input, shape index: {}]
  %s13 = inlined_call_operand.vmem [shape: f32[32,16], index: 13, kind: input, shape index: {}]
  %s14 = inlined_call_operand.vmem [shape: f32[1,16], index: 14, kind: input, shape index: {}]
  %s15 = inlined_call_operand.vmem [shape: f32[16,32], index: 15, kind: input, shape index: {}]
  %s16 = inlined_call_operand.vmem [shape: f32[1,32], index: 16, kind: input, shape index: {}]
  %s17 = inlined_call_operand.vmem [shape: f32[32,12], index: 17, kind: input, shape index: {}]
  %s18 = inlined_call_operand.vmem [shape: f32[1,12], index: 18, kind: input, shape index: {}]
  %s19 = inlined_call_operand.hbm [shape: f32[5], index: 19, kind: output, shape index: {}]
  %s20 = sld [smem:[#allocation0]]
  $region86: #{tpu_custom_call.1} parent=0
    _
  %s22 = ssub.s32 1, %s20
  %s23 = scalar_select 0, %s22, %s20
  $region1: #{tpu_custom_call.1} parent=0
    #allocation2 [shape = 'u8[512]{0}', space=smem, size = 0x200, scoped, tag = 'output window, operand 0, single buffered']
    #allocation3 [shape = 's32[1]{0}', space=sflag, size = 0x4, scoped, tag = 'scoped memory for tpu_custom_call.1']
    %24 = vsyncpa [#allocation3], 0
    // Predicated region
    $region2: #{tpu_custom_call.1} parent=1 // pred_check
      _
    $region3: #{tpu_custom_call.1} parent=1 // pred_check_branch
      %26 = sbr.rel (0) target = $region5
    $region4: #{tpu_custom_call.1} parent=1 // pred_region
      _
    $region5: #{tpu_custom_call.1} parent=1 // pred_fallthru
      _
    // Predicated region
    $region6: #{tpu_custom_call.1} parent=1 // pred_check
      _
    $region7: #{tpu_custom_call.1} parent=1 // pred_check_branch
      %28 = sbr.rel (0) target = $region9
    $region8: #{tpu_custom_call.1} parent=1 // pred_region
      _
    $region9: #{tpu_custom_call.1} parent=1 // pred_fallthru
      _
    // Predicated region
    $region10: #{tpu_custom_call.1} parent=1 // pred_check
      _
    $region11: #{tpu_custom_call.1} parent=1 // pred_check_branch
      %30 = sbr.rel (0) target = $region13
    $region12: #{tpu_custom_call.1} parent=1 // pred_region
      _
    $region13: #{tpu_custom_call.1} parent=1 // pred_fallthru
      _
    // Predicated region
    $region14: #{tpu_custom_call.1} parent=1 // pred_check
      _
    $region15: #{tpu_custom_call.1} parent=1 // pred_check_branch
      %32 = sbr.rel (0) target = $region17
    $region16: #{tpu_custom_call.1} parent=1 // pred_region
      _
    $region17: #{tpu_custom_call.1} parent=1 // pred_fallthru
      _
    // Predicated region
    $region18: #{tpu_custom_call.1} parent=1 // pred_check
      _
    $region19: #{tpu_custom_call.1} parent=1 // pred_check_branch
      %34 = sbr.rel (0) target = $region21
    $region20: #{tpu_custom_call.1} parent=1 // pred_region
      _
    $region21: #{tpu_custom_call.1} parent=1 // pred_fallthru
      _
    // Predicated region
    $region22: #{tpu_custom_call.1} parent=1 // pred_check
      _
    $region23: #{tpu_custom_call.1} parent=1 // pred_check_branch
      %36 = sbr.rel (0) target = $region25
    $region24: #{tpu_custom_call.1} parent=1 // pred_region
      _
    $region25: #{tpu_custom_call.1} parent=1 // pred_fallthru
      _
    // Predicated region
    $region26: #{tpu_custom_call.1} parent=1 // pred_check
      _
    $region27: #{tpu_custom_call.1} parent=1 // pred_check_branch
      %38 = sbr.rel (0) target = $region29
    $region28: #{tpu_custom_call.1} parent=1 // pred_region
      _
    $region29: #{tpu_custom_call.1} parent=1 // pred_fallthru
      _
    // Predicated region
    $region30: #{tpu_custom_call.1} parent=1 // pred_check
      _
    $region31: #{tpu_custom_call.1} parent=1 // pred_check_branch
      %40 = sbr.rel (0) target = $region33
    $region32: #{tpu_custom_call.1} parent=1 // pred_region
      _
    $region33: #{tpu_custom_call.1} parent=1 // pred_fallthru
      _
    // Predicated region
    $region34: #{tpu_custom_call.1} parent=1 // pred_check
      _
    $region35: #{tpu_custom_call.1} parent=1 // pred_check_branch
      %42 = sbr.rel (0) target = $region37
    $region36: #{tpu_custom_call.1} parent=1 // pred_region
      _
    $region37: #{tpu_custom_call.1} parent=1 // pred_fallthru
      _
    // Predicated region
    $region38: #{tpu_custom_call.1} parent=1 // pred_check
      _
    $region39: #{tpu_custom_call.1} parent=1 // pred_check_branch
      %44 = sbr.rel (0) target = $region41
    $region40: #{tpu_custom_call.1} parent=1 // pred_region
      _
    $region41: #{tpu_custom_call.1} parent=1 // pred_fallthru
      _
    // Predicated region
    $region42: #{tpu_custom_call.1} parent=1 // pred_check
      _
    $region43: #{tpu_custom_call.1} parent=1 // pred_check_branch
      %46 = sbr.rel (0) target = $region45
    $region44: #{tpu_custom_call.1} parent=1 // pred_region
      _
    $region45: #{tpu_custom_call.1} parent=1 // pred_fallthru
      _
    // Predicated region
    $region46: #{tpu_custom_call.1} parent=1 // pred_check
      _
    $region47: #{tpu_custom_call.1} parent=1 // pred_check_branch
      %48 = sbr.rel (0) target = $region49
    $region48: #{tpu_custom_call.1} parent=1 // pred_region
      _
    $region49: #{tpu_custom_call.1} parent=1 // pred_fallthru
      _
    // Predicated region
    $region50: #{tpu_custom_call.1} parent=1 // pred_check
      _
    $region51: #{tpu_custom_call.1} parent=1 // pred_check_branch
      %50 = sbr.rel (0) target = $region53
    $region52: #{tpu_custom_call.1} parent=1 // pred_region
      _
    $region53: #{tpu_custom_call.1} parent=1 // pred_fallthru
      _
    // Predicated region
    $region54: #{tpu_custom_call.1} parent=1 // pred_check
      _
    $region55: #{tpu_custom_call.1} parent=1 // pred_check_branch
      %52 = sbr.rel (0) target = $region57
    $region56: #{tpu_custom_call.1} parent=1 // pred_region
      _
    $region57: #{tpu_custom_call.1} parent=1 // pred_fallthru
      _
    // Predicated region
    $region58: #{tpu_custom_call.1} parent=1 // pred_check
      _
    $region59: #{tpu_custom_call.1} parent=1 // pred_check_branch
      %54 = sbr.rel (0) target = $region61
    $region60: #{tpu_custom_call.1} parent=1 // pred_region
      _
    $region61: #{tpu_custom_call.1} parent=1 // pred_fallthru
      _
    // Predicated region
    $region62: #{tpu_custom_call.1} parent=1 // pred_check
      _
    $region63: #{tpu_custom_call.1} parent=1 // pred_check_branch
      %56 = sbr.rel (0) target = $region65
    $region64: #{tpu_custom_call.1} parent=1 // pred_region
      _
    $region65: #{tpu_custom_call.1} parent=1 // pred_fallthru
      _
    // Predicated region
    $region66: #{tpu_custom_call.1} parent=1 // pred_check
      _
    $region67: #{tpu_custom_call.1} parent=1 // pred_check_branch
      %58 = sbr.rel (0) target = $region69
    $region68: #{tpu_custom_call.1} parent=1 // pred_region
      _
    $region69: #{tpu_custom_call.1} parent=1 // pred_fallthru
      _
    // Predicated region
    $region70: #{tpu_custom_call.1} parent=1 // pred_check
      _
    $region71: #{tpu_custom_call.1} parent=1 // pred_check_branch
      %60 = sbr.rel (0) target = $region73
    $region72: #{tpu_custom_call.1} parent=1 // pred_region
      _
    $region73: #{tpu_custom_call.1} parent=1 // pred_fallthru
      _
    // Predicated region
    $region74: #{tpu_custom_call.1} parent=1 // pred_check
      _
    $region75: #{tpu_custom_call.1} parent=1 // pred_check_branch
      %62 = sbr.rel (0) target = $region77
    $region76: #{tpu_custom_call.1} parent=1 // pred_region
      _
    $region77: #{tpu_custom_call.1} parent=1 // pred_fallthru
      _
    %v63 = vld [vmem:[%s0] sm:$0xff]
    %v64 = vld [vmem:[%s1] sm:$0xff]
    %v65 = vld [vmem:[%s3] sm:$0xff]
    %v66 = vld [vmem:[%s3 + $0x8] sm:$0xff]
    %v67 = vld [vmem:[%s4] sm:$0x1]
    %v69 = vlaneseq
    %v70 = vshrl.u32 %v69, 7
    %v71 = vsub.s32 0, %v70
    %v72 = vrot.slane %v67, %v71
    %vm74 = vcmask 130048
    %v76 = vsel %vm74, %v63, 0
    %78 = vmatprep.subr.mxu0 0.0
    %79 = vmatpush1.msra.mxu0 %v65
    %80 = vmatprep.subr.mxu0 0.0
    %81 = vmatpush1.msra.mxu0 %v66
    %82 = vmatprep.subr.mxu0 0.0
    %83 = vmatpush1.msra.mxu0 0.0
    %84 = vmatprep.subr.mxu0 0.0
    %85 = vmatpush1.msra.mxu0 0.0
    %86 = vmatprep.subr.mxu0 0.0
    %87 = vmatpush1.msra.mxu0 0.0
    %88 = vmatprep.subr.mxu0 0.0
    %89 = vmatpush1.msra.mxu0 0.0
    %90 = vmatprep.subr.mxu0 0.0
    %91 = vmatpush1.msra.mxu0 0.0
    %92 = vmatprep.subr.mxu0 0.0
    %93 = vmatpush1.msra.mxu0 0.0
    %94 = vmatprep.subr.mxu0 0.0
    %95 = vmatpush1.msra.mxu0 0.0
    %96 = vmatprep.subr.mxu0 0.0
    %97 = vmatpush1.msra.mxu0 0.0
    %98 = vmatprep.subr.mxu0 0.0
    %99 = vmatpush1.msra.mxu0 0.0
    %100 = vmatprep.subr.mxu0 0.0
    %101 = vmatpush1.msra.mxu0 0.0
    %102 = vmatprep.subr.mxu0 0.0
    %103 = vmatpush1.msra.mxu0 0.0
    %104 = vmatprep.subr.mxu0 0.0
    %105 = vmatpush1.msra.mxu0 0.0
    %106 = vmatprep.subr.mxu0 0.0
    %107 = vmatpush1.msra.mxu0 0.0
    %108 = vmatprep.subr.mxu0 0.0
    %109 = vmatpush1.msra.mxu0 0.0
    %110 = vmatprep.subr.mxu0 0.0
    %111 = vmatpush1.msra.mxu0 0.0
    %112 = vmatprep.subr.mxu0 0.0
    %113 = vmatpush1.msra.mxu0 0.0
    %114 = vmatprep.subr.mxu0 0.0
    %115 = vmatpush1.msra.mxu0 0.0
    %116 = vmatprep.subr.mxu0 0.0
    %117 = vmatpush1.msra.mxu0 0.0
    %118 = vmatprep.subr.mxu0 0.0
    %119 = vmatpush1.msra.mxu0 0.0
    %120 = vmatprep.subr.mxu0 0.0
    %121 = vmatpush1.msra.mxu0 0.0
    %122 = vmatprep.subr.mxu0 0.0
    %123 = vmatpush1.msra.mxu0 0.0
    %124 = vmatprep.subr.mxu0 0.0
    %125 = vmatpush1.msra.mxu0 0.0
    %126 = vmatprep.subr.mxu0 0.0
    %127 = vmatpush1.msra.mxu0 0.0
    %128 = vmatprep.subr.mxu0 0.0
    %129 = vmatpush1.msra.mxu0 0.0
    %130 = vmatprep.subr.mxu0 0.0
    %131 = vmatpush1.msra.mxu0 0.0
    %132 = vmatprep.subr.mxu0 0.0
    %133 = vmatpush1.msra.mxu0 0.0
    %134 = vmatprep.subr.mxu0 0.0
    %135 = vmatpush1.msra.mxu0 0.0
    %136 = vmatprep.subr.mxu0 0.0
    %137 = vmatpush1.msra.mxu0 0.0
    %138 = vmatprep.subr.mxu0 0.0
    %139 = vmatpush1.msra.mxu0 0.0
    %140 = vmatprep.subr.mxu0 0.0
    %141 = vmatpush1.msra.mxu0 0.0
    %142 = vmatprep.mubr.f32.mxu0 0.0
    %143 = vmatmul.mubr.f32.gmra.mrb[0].mxu0 %v76
    %v144 = vpop.f32.mrb[0].mxu0
    %v145 = vadd.f32 %v72, %v144
    %v146 = vpop.f32.mrb[0].mxu0
    %147 = vdwg.mxu0
    %v148 = vmax.f32 %v145, 0.0
    %v149 = vld [vmem:[%s5] sm:$0xff]
    %v150 = vld [vmem:[%s5 + $0x8] sm:$0xff]
    %v151 = vld [vmem:[%s5 + $0x10] sm:$0xff]
    %v152 = vld [vmem:[%s5 + $0x18] sm:$0xff]
    %v153 = vld [vmem:[%s6] sm:$0x1]
    %v155 = vlaneseq
    %v156 = vshrl.u32 %v155, 7
    %v157 = vsub.s32 0, %v156
    %v158 = vrot.slane %v153, %v157
    %vm160 = vcmask 261120
    %v162 = vsel %vm160, %v148, 0
    %164 = vmatprep.subr.mxu0 0.0
    %165 = vmatpush1.msra.mxu0 %v149
    %166 = vmatprep.subr.mxu0 0.0
    %167 = vmatpush1.msra.mxu0 %v150
    %168 = vmatprep.subr.mxu0 0.0
    %169 = vmatpush1.msra.mxu0 %v151
    %170 = vmatprep.subr.mxu0 0.0
    %171 = vmatpush1.msra.mxu0 %v152
    %172 = vmatprep.subr.mxu0 0.0
    %173 = vmatpush1.msra.mxu0 0.0
    %174 = vmatprep.subr.mxu0 0.0
    %175 = vmatpush1.msra.mxu0 0.0
    %176 = vmatprep.subr.mxu0 0.0
    %177 = vmatpush1.msra.mxu0 0.0
    %178 = vmatprep.subr.mxu0 0.0
    %179 = vmatpush1.msra.mxu0 0.0
    %180 = vmatprep.subr.mxu0 0.0
    %181 = vmatpush1.msra.mxu0 0.0
    %182 = vmatprep.subr.mxu0 0.0
    %183 = vmatpush1.msra.mxu0 0.0
    %184 = vmatprep.subr.mxu0 0.0
    %185 = vmatpush1.msra.mxu0 0.0
    %186 = vmatprep.subr.mxu0 0.0
    %187 = vmatpush1.msra.mxu0 0.0
    %188 = vmatprep.subr.mxu0 0.0
    %189 = vmatpush1.msra.mxu0 0.0
    %190 = vmatprep.subr.mxu0 0.0
    %191 = vmatpush1.msra.mxu0 0.0
    %192 = vmatprep.subr.mxu0 0.0
    %193 = vmatpush1.msra.mxu0 0.0
    %194 = vmatprep.subr.mxu0 0.0
    %195 = vmatpush1.msra.mxu0 0.0
    %196 = vmatprep.subr.mxu0 0.0
    %197 = vmatpush1.msra.mxu0 0.0
    %198 = vmatprep.subr.mxu0 0.0
    %199 = vmatpush1.msra.mxu0 0.0
    %200 = vmatprep.subr.mxu0 0.0
    %201 = vmatpush1.msra.mxu0 0.0
    %202 = vmatprep.subr.mxu0 0.0
    %203 = vmatpush1.msra.mxu0 0.0
    %204 = vmatprep.subr.mxu0 0.0
    %205 = vmatpush1.msra.mxu0 0.0
    %206 = vmatprep.subr.mxu0 0.0
    %207 = vmatpush1.msra.mxu0 0.0
    %208 = vmatprep.subr.mxu0 0.0
    %209 = vmatpush1.msra.mxu0 0.0
    %210 = vmatprep.subr.mxu0 0.0
    %211 = vmatpush1.msra.mxu0 0.0
    %212 = vmatprep.subr.mxu0 0.0
    %213 = vmatpush1.msra.mxu0 0.0
    %214 = vmatprep.subr.mxu0 0.0
    %215 = vmatpush1.msra.mxu0 0.0
    %216 = vmatprep.subr.mxu0 0.0
    %217 = vmatpush1.msra.mxu0 0.0
    %218 = vmatprep.subr.mxu0 0.0
    %219 = vmatpush1.msra.mxu0 0.0
    %220 = vmatprep.subr.mxu0 0.0
    %221 = vmatpush1.msra.mxu0 0.0
    %222 = vmatprep.subr.mxu0 0.0
    %223 = vmatpush1.msra.mxu0 0.0
    %224 = vmatprep.subr.mxu0 0.0
    %225 = vmatpush1.msra.mxu0 0.0
    %226 = vmatprep.subr.mxu0 0.0
    %227 = vmatpush1.msra.mxu0 0.0
    %228 = vmatprep.mubr.f32.mxu0 0.0
    %229 = vmatmul.mubr.f32.gmra.mrb[0].mxu0 %v162
    %v230 = vpop.f32.mrb[0].mxu0
    %v231 = vadd.f32 %v158, %v230
    %v232 = vpop.f32.mrb[0].mxu0
    %233 = vdwg.mxu0
    %s234 = scalar_lea.vmem %s5, 32
    %v235 = vld [vmem:[%s234] sm:$0xff]
    %v236 = vld [vmem:[%s234 + $0x8] sm:$0xff]
    %v237 = vld [vmem:[%s234 + $0x10] sm:$0xff]
    %v238 = vld [vmem:[%s234 + $0x18] sm:$0xff]
    %s239 = scalar_lea.vmem %s6, 1
    %v240 = vld [vmem:[%s239] sm:$0x1]
    %v242 = vlaneseq
    %v243 = vshrl.u32 %v242, 7
    %v244 = vsub.s32 0, %v243
    %v245 = vrot.slane %v240, %v244
    %247 = vmatprep.subr.mxu0 0.0
    %248 = vmatpush1.msra.mxu0 %v235
    %249 = vmatprep.subr.mxu0 0.0
    %250 = vmatpush1.msra.mxu0 %v236
    %251 = vmatprep.subr.mxu0 0.0
    %252 = vmatpush1.msra.mxu0 %v237
    %253 = vmatprep.subr.mxu0 0.0
    %254 = vmatpush1.msra.mxu0 %v238
    %255 = vmatprep.subr.mxu0 0.0
    %256 = vmatpush1.msra.mxu0 0.0
    %257 = vmatprep.subr.mxu0 0.0
    %258 = vmatpush1.msra.mxu0 0.0
    %259 = vmatprep.subr.mxu0 0.0
    %260 = vmatpush1.msra.mxu0 0.0
    %261 = vmatprep.subr.mxu0 0.0
    %262 = vmatpush1.msra.mxu0 0.0
    %263 = vmatprep.subr.mxu0 0.0
    %264 = vmatpush1.msra.mxu0 0.0
    %265 = vmatprep.subr.mxu0 0.0
    %266 = vmatpush1.msra.mxu0 0.0
    %267 = vmatprep.subr.mxu0 0.0
    %268 = vmatpush1.msra.mxu0 0.0
    %269 = vmatprep.subr.mxu0 0.0
    %270 = vmatpush1.msra.mxu0 0.0
    %271 = vmatprep.subr.mxu0 0.0
    %272 = vmatpush1.msra.mxu0 0.0
    %273 = vmatprep.subr.mxu0 0.0
    %274 = vmatpush1.msra.mxu0 0.0
    %275 = vmatprep.subr.mxu0 0.0
    %276 = vmatpush1.msra.mxu0 0.0
    %277 = vmatprep.subr.mxu0 0.0
    %278 = vmatpush1.msra.mxu0 0.0
    %279 = vmatprep.subr.mxu0 0.0
    %280 = vmatpush1.msra.mxu0 0.0
    %281 = vmatprep.subr.mxu0 0.0
    %282 = vmatpush1.msra.mxu0 0.0
    %283 = vmatprep.subr.mxu0 0.0
    %284 = vmatpush1.msra.mxu0 0.0
    %285 = vmatprep.subr.mxu0 0.0
    %286 = vmatpush1.msra.mxu0 0.0
    %287 = vmatprep.subr.mxu0 0.0
    %288 = vmatpush1.msra.mxu0 0.0
    %289 = vmatprep.subr.mxu0 0.0
    %290 = vmatpush1.msra.mxu0 0.0
    %291 = vmatprep.subr.mxu0 0.0
    %292 = vmatpush1.msra.mxu0 0.0
    %293 = vmatprep.subr.mxu0 0.0
    %294 = vmatpush1.msra.mxu0 0.0
    %295 = vmatprep.subr.mxu0 0.0
    %296 = vmatpush1.msra.mxu0 0.0
    %297 = vmatprep.subr.mxu0 0.0
    %298 = vmatpush1.msra.mxu0 0.0
    %299 = vmatprep.subr.mxu0 0.0
    %300 = vmatpush1.msra.mxu0 0.0
    %301 = vmatprep.subr.mxu0 0.0
    %302 = vmatpush1.msra.mxu0 0.0
    %303 = vmatprep.subr.mxu0 0.0
    %304 = vmatpush1.msra.mxu0 0.0
    %305 = vmatprep.subr.mxu0 0.0
    %306 = vmatpush1.msra.mxu0 0.0
    %307 = vmatprep.subr.mxu0 0.0
    %308 = vmatpush1.msra.mxu0 0.0
    %309 = vmatprep.subr.mxu0 0.0
    %310 = vmatpush1.msra.mxu0 0.0
    %311 = vmatprep.mubr.f32.mxu0 0.0
    %312 = vmatmul.mubr.f32.gmra.mrb[0].mxu0 %v162
    %v313 = vpop.f32.mrb[0].mxu0
    %v314 = vadd.f32 %v245, %v313
    %v315 = vpop.f32.mrb[0].mxu0
    %316 = vdwg.mxu0
    %s317 = scalar_lea.vmem %s5, 64
    %v318 = vld [vmem:[%s317] sm:$0xff]
    %v319 = vld [vmem:[%s317 + $0x8] sm:$0xff]
    %v320 = vld [vmem:[%s317 + $0x10] sm:$0xff]
    %v321 = vld [vmem:[%s317 + $0x18] sm:$0xff]
    %s322 = scalar_lea.vmem %s6, 2
    %v323 = vld [vmem:[%s322] sm:$0x1]
    %v325 = vlaneseq
    %v326 = vshrl.u32 %v325, 7
    %v327 = vsub.s32 0, %v326
    %v328 = vrot.slane %v323, %v327
    %330 = vmatprep.subr.mxu0 0.0
    %331 = vmatpush1.msra.mxu0 %v318
    %332 = vmatprep.subr.mxu0 0.0
    %333 = vmatpush1.msra.mxu0 %v319
    %334 = vmatprep.subr.mxu0 0.0
    %335 = vmatpush1.msra.mxu0 %v320
    %336 = vmatprep.subr.mxu0 0.0
    %337 = vmatpush1.msra.mxu0 %v321
    %338 = vmatprep.subr.mxu0 0.0
    %339 = vmatpush1.msra.mxu0 0.0
    %340 = vmatprep.subr.mxu0 0.0
    %341 = vmatpush1.msra.mxu0 0.0
    %342 = vmatprep.subr.mxu0 0.0
    %343 = vmatpush1.msra.mxu0 0.0
    %344 = vmatprep.subr.mxu0 0.0
    %345 = vmatpush1.msra.mxu0 0.0
    %346 = vmatprep.subr.mxu0 0.0
    %347 = vmatpush1.msra.mxu0 0.0
    %348 = vmatprep.subr.mxu0 0.0
    %349 = vmatpush1.msra.mxu0 0.0
    %350 = vmatprep.subr.mxu0 0.0
    %351 = vmatpush1.msra.mxu0 0.0
    %352 = vmatprep.subr.mxu0 0.0
    %353 = vmatpush1.msra.mxu0 0.0
    %354 = vmatprep.subr.mxu0 0.0
    %355 = vmatpush1.msra.mxu0 0.0
    %356 = vmatprep.subr.mxu0 0.0
    %357 = vmatpush1.msra.mxu0 0.0
    %358 = vmatprep.subr.mxu0 0.0
    %359 = vmatpush1.msra.mxu0 0.0
    %360 = vmatprep.subr.mxu0 0.0
    %361 = vmatpush1.msra.mxu0 0.0
    %362 = vmatprep.subr.mxu0 0.0
    %363 = vmatpush1.msra.mxu0 0.0
    %364 = vmatprep.subr.mxu0 0.0
    %365 = vmatpush1.msra.mxu0 0.0
    %366 = vmatprep.subr.mxu0 0.0
    %367 = vmatpush1.msra.mxu0 0.0
    %368 = vmatprep.subr.mxu0 0.0
    %369 = vmatpush1.msra.mxu0 0.0
    %370 = vmatprep.subr.mxu0 0.0
    %371 = vmatpush1.msra.mxu0 0.0
    %372 = vmatprep.subr.mxu0 0.0
    %373 = vmatpush1.msra.mxu0 0.0
    %374 = vmatprep.subr.mxu0 0.0
    %375 = vmatpush1.msra.mxu0 0.0
    %376 = vmatprep.subr.mxu0 0.0
    %377 = vmatpush1.msra.mxu0 0.0
    %378 = vmatprep.subr.mxu0 0.0
    %379 = vmatpush1.msra.mxu0 0.0
    %380 = vmatprep.subr.mxu0 0.0
    %381 = vmatpush1.msra.mxu0 0.0
    %382 = vmatprep.subr.mxu0 0.0
    %383 = vmatpush1.msra.mxu0 0.0
    %384 = vmatprep.subr.mxu0 0.0
    %385 = vmatpush1.msra.mxu0 0.0
    %386 = vmatprep.subr.mxu0 0.0
    %387 = vmatpush1.msra.mxu0 0.0
    %388 = vmatprep.subr.mxu0 0.0
    %389 = vmatpush1.msra.mxu0 0.0
    %390 = vmatprep.subr.mxu0 0.0
    %391 = vmatpush1.msra.mxu0 0.0
    %392 = vmatprep.subr.mxu0 0.0
    %393 = vmatpush1.msra.mxu0 0.0
    %394 = vmatprep.mubr.f32.mxu0 0.0
    %395 = vmatmul.mubr.f32.gmra.mrb[0].mxu0 %v162
    %v396 = vpop.f32.mrb[0].mxu0
    %v397 = vadd.f32 %v328, %v396
    %v398 = vpop.f32.mrb[0].mxu0
    %399 = vdwg.mxu0
    %s400 = scalar_lea.vmem %s5, 96
    %v401 = vld [vmem:[%s400] sm:$0xff]
    %v402 = vld [vmem:[%s400 + $0x8] sm:$0xff]
    %v403 = vld [vmem:[%s400 + $0x10] sm:$0xff]
    %v404 = vld [vmem:[%s400 + $0x18] sm:$0xff]
    %s405 = scalar_lea.vmem %s6, 3
    %v406 = vld [vmem:[%s405] sm:$0x1]
    %v408 = vlaneseq
    %v409 = vshrl.u32 %v408, 7
    %v410 = vsub.s32 0, %v409
    %v411 = vrot.slane %v406, %v410
    %413 = vmatprep.subr.mxu0 0.0
    %414 = vmatpush1.msra.mxu0 %v401
    %415 = vmatprep.subr.mxu0 0.0
    %416 = vmatpush1.msra.mxu0 %v402
    %417 = vmatprep.subr.mxu0 0.0
    %418 = vmatpush1.msra.mxu0 %v403
    %419 = vmatprep.subr.mxu0 0.0
    %420 = vmatpush1.msra.mxu0 %v404
    %421 = vmatprep.subr.mxu0 0.0
    %422 = vmatpush1.msra.mxu0 0.0
    %423 = vmatprep.subr.mxu0 0.0
    %424 = vmatpush1.msra.mxu0 0.0
    %425 = vmatprep.subr.mxu0 0.0
    %426 = vmatpush1.msra.mxu0 0.0
    %427 = vmatprep.subr.mxu0 0.0
    %428 = vmatpush1.msra.mxu0 0.0
    %429 = vmatprep.subr.mxu0 0.0
    %430 = vmatpush1.msra.mxu0 0.0
    %431 = vmatprep.subr.mxu0 0.0
    %432 = vmatpush1.msra.mxu0 0.0
    %433 = vmatprep.subr.mxu0 0.0
    %434 = vmatpush1.msra.mxu0 0.0
    %435 = vmatprep.subr.mxu0 0.0
    %436 = vmatpush1.msra.mxu0 0.0
    %437 = vmatprep.subr.mxu0 0.0
    %438 = vmatpush1.msra.mxu0 0.0
    %439 = vmatprep.subr.mxu0 0.0
    %440 = vmatpush1.msra.mxu0 0.0
    %441 = vmatprep.subr.mxu0 0.0
    %442 = vmatpush1.msra.mxu0 0.0
    %443 = vmatprep.subr.mxu0 0.0
    %444 = vmatpush1.msra.mxu0 0.0
    %445 = vmatprep.subr.mxu0 0.0
    %446 = vmatpush1.msra.mxu0 0.0
    %447 = vmatprep.subr.mxu0 0.0
    %448 = vmatpush1.msra.mxu0 0.0
    %449 = vmatprep.subr.mxu0 0.0
    %450 = vmatpush1.msra.mxu0 0.0
    %451 = vmatprep.subr.mxu0 0.0
    %452 = vmatpush1.msra.mxu0 0.0
    %453 = vmatprep.subr.mxu0 0.0
    %454 = vmatpush1.msra.mxu0 0.0
    %455 = vmatprep.subr.mxu0 0.0
    %456 = vmatpush1.msra.mxu0 0.0
    %457 = vmatprep.subr.mxu0 0.0
    %458 = vmatpush1.msra.mxu0 0.0
    %459 = vmatprep.subr.mxu0 0.0
    %460 = vmatpush1.msra.mxu0 0.0
    %461 = vmatprep.subr.mxu0 0.0
    %462 = vmatpush1.msra.mxu0 0.0
    %463 = vmatprep.subr.mxu0 0.0
    %464 = vmatpush1.msra.mxu0 0.0
    %465 = vmatprep.subr.mxu0 0.0
    %466 = vmatpush1.msra.mxu0 0.0
    %467 = vmatprep.subr.mxu0 0.0
    %468 = vmatpush1.msra.mxu0 0.0
    %469 = vmatprep.subr.mxu0 0.0
    %470 = vmatpush1.msra.mxu0 0.0
    %471 = vmatprep.subr.mxu0 0.0
    %472 = vmatpush1.msra.mxu0 0.0
    %473 = vmatprep.subr.mxu0 0.0
    %474 = vmatpush1.msra.mxu0 0.0
    %475 = vmatprep.subr.mxu0 0.0
    %476 = vmatpush1.msra.mxu0 0.0
    %477 = vmatprep.mubr.f32.mxu0 0.0
    %478 = vmatmul.mubr.f32.gmra.mrb[0].mxu0 %v162
    %v479 = vpop.f32.mrb[0].mxu0
    %v480 = vadd.f32 %v411, %v479
    %v481 = vpop.f32.mrb[0].mxu0
    %482 = vdwg.mxu0
    %v483 = vld [vmem:[%s7] sm:$0xff]
    %v484 = vld [vmem:[%s7 + $0x8] sm:$0xf]
    %v485 = vld [vmem:[%s8] sm:$0x1]
    %v487 = vlaneseq
    %v488 = vshrl.u32 %v487, 7
    %v489 = vsub.s32 0, %v488
    %v490 = vrot.slane %v485, %v489
    %vm492 = vcmask 97280
    %v494 = vsel %vm492, %v64, 0
    %vm496 = vcmask 1043456
    %v498 = vsel %vm496, %v484, 0
    %500 = vmatprep.subr.mxu0 0.0
    %501 = vmatpush1.msra.mxu0 %v483
    %502 = vmatprep.subr.mxu0 0.0
    %503 = vmatpush1.msra.mxu0 %v498
    %504 = vmatprep.subr.mxu0 0.0
    %505 = vmatpush1.msra.mxu0 0.0
    %506 = vmatprep.subr.mxu0 0.0
    %507 = vmatpush1.msra.mxu0 0.0
    %508 = vmatprep.subr.mxu0 0.0
    %509 = vmatpush1.msra.mxu0 0.0
    %510 = vmatprep.subr.mxu0 0.0
    %511 = vmatpush1.msra.mxu0 0.0
    %512 = vmatprep.subr.mxu0 0.0
    %513 = vmatpush1.msra.mxu0 0.0
    %514 = vmatprep.subr.mxu0 0.0
    %515 = vmatpush1.msra.mxu0 0.0
    %516 = vmatprep.subr.mxu0 0.0
    %517 = vmatpush1.msra.mxu0 0.0
    %518 = vmatprep.subr.mxu0 0.0
    %519 = vmatpush1.msra.mxu0 0.0
    %520 = vmatprep.subr.mxu0 0.0
    %521 = vmatpush1.msra.mxu0 0.0
    %522 = vmatprep.subr.mxu0 0.0
    %523 = vmatpush1.msra.mxu0 0.0
    %524 = vmatprep.subr.mxu0 0.0
    %525 = vmatpush1.msra.mxu0 0.0
    %526 = vmatprep.subr.mxu0 0.0
    %527 = vmatpush1.msra.mxu0 0.0
    %528 = vmatprep.subr.mxu0 0.0
    %529 = vmatpush1.msra.mxu0 0.0
    %530 = vmatprep.subr.mxu0 0.0
    %531 = vmatpush1.msra.mxu0 0.0
    %532 = vmatprep.subr.mxu0 0.0
    %533 = vmatpush1.msra.mxu0 0.0
    %534 = vmatprep.subr.mxu0 0.0
    %535 = vmatpush1.msra.mxu0 0.0
    %536 = vmatprep.subr.mxu0 0.0
    %537 = vmatpush1.msra.mxu0 0.0
    %538 = vmatprep.subr.mxu0 0.0
    %539 = vmatpush1.msra.mxu0 0.0
    %540 = vmatprep.subr.mxu0 0.0
    %541 = vmatpush1.msra.mxu0 0.0
    %542 = vmatprep.subr.mxu0 0.0
    %543 = vmatpush1.msra.mxu0 0.0
    %544 = vmatprep.subr.mxu0 0.0
    %545 = vmatpush1.msra.mxu0 0.0
    %546 = vmatprep.subr.mxu0 0.0
    %547 = vmatpush1.msra.mxu0 0.0
    %548 = vmatprep.subr.mxu0 0.0
    %549 = vmatpush1.msra.mxu0 0.0
    %550 = vmatprep.subr.mxu0 0.0
    %551 = vmatpush1.msra.mxu0 0.0
    %552 = vmatprep.subr.mxu0 0.0
    %553 = vmatpush1.msra.mxu0 0.0
    %554 = vmatprep.subr.mxu0 0.0
    %555 = vmatpush1.msra.mxu0 0.0
    %556 = vmatprep.subr.mxu0 0.0
    %557 = vmatpush1.msra.mxu0 0.0
    %558 = vmatprep.subr.mxu0 0.0
    %559 = vmatpush1.msra.mxu0 0.0
    %560 = vmatprep.subr.mxu0 0.0
    %561 = vmatpush1.msra.mxu0 0.0
    %562 = vmatprep.subr.mxu0 0.0
    %563 = vmatpush1.msra.mxu0 0.0
    %564 = vmatprep.mubr.f32.mxu0 0.0
    %565 = vmatmul.mubr.f32.gmra.mrb[0].mxu0 %v494
    %v566 = vpop.f32.mrb[0].mxu0
    %v567 = vadd.f32 %v490, %v566
    %v568 = vpop.f32.mrb[0].mxu0
    %569 = vdwg.mxu0
    %v570 = vmax.f32 %v567, 0.0
    %v571 = vld [vmem:[%s9] sm:$0xff]
    %v572 = vld [vmem:[%s9 + $0x8] sm:$0xff]
    %v573 = vld [vmem:[%s9 + $0x10] sm:$0xff]
    %v574 = vld [vmem:[%s9 + $0x18] sm:$0xff]
    %v575 = vld [vmem:[%s10] sm:$0x1]
    %v577 = vlaneseq
    %v578 = vshrl.u32 %v577, 7
    %v579 = vsub.s32 0, %v578
    %v580 = vrot.slane %v575, %v579
    %v583 = vsel %vm160, %v570, 0
    %585 = vmatprep.subr.mxu0 0.0
    %586 = vmatpush1.msra.mxu0 %v571
    %587 = vmatprep.subr.mxu0 0.0
    %588 = vmatpush1.msra.mxu0 %v572
    %589 = vmatprep.subr.mxu0 0.0
    %590 = vmatpush1.msra.mxu0 %v573
    %591 = vmatprep.subr.mxu0 0.0
    %592 = vmatpush1.msra.mxu0 %v574
    %593 = vmatprep.subr.mxu0 0.0
    %594 = vmatpush1.msra.mxu0 0.0
    %595 = vmatprep.subr.mxu0 0.0
    %596 = vmatpush1.msra.mxu0 0.0
    %597 = vmatprep.subr.mxu0 0.0
    %598 = vmatpush1.msra.mxu0 0.0
    %599 = vmatprep.subr.mxu0 0.0
    %600 = vmatpush1.msra.mxu0 0.0
    %601 = vmatprep.subr.mxu0 0.0
    %602 = vmatpush1.msra.mxu0 0.0
    %603 = vmatprep.subr.mxu0 0.0
    %604 = vmatpush1.msra.mxu0 0.0
    %605 = vmatprep.subr.mxu0 0.0
    %606 = vmatpush1.msra.mxu0 0.0
    %607 = vmatprep.subr.mxu0 0.0
    %608 = vmatpush1.msra.mxu0 0.0
    %609 = vmatprep.subr.mxu0 0.0
    %610 = vmatpush1.msra.mxu0 0.0
    %611 = vmatprep.subr.mxu0 0.0
    %612 = vmatpush1.msra.mxu0 0.0
    %613 = vmatprep.subr.mxu0 0.0
    %614 = vmatpush1.msra.mxu0 0.0
    %615 = vmatprep.subr.mxu0 0.0
    %616 = vmatpush1.msra.mxu0 0.0
    %617 = vmatprep.subr.mxu0 0.0
    %618 = vmatpush1.msra.mxu0 0.0
    %619 = vmatprep.subr.mxu0 0.0
    %620 = vmatpush1.msra.mxu0 0.0
    %621 = vmatprep.subr.mxu0 0.0
    %622 = vmatpush1.msra.mxu0 0.0
    %623 = vmatprep.subr.mxu0 0.0
    %624 = vmatpush1.msra.mxu0 0.0
    %625 = vmatprep.subr.mxu0 0.0
    %626 = vmatpush1.msra.mxu0 0.0
    %627 = vmatprep.subr.mxu0 0.0
    %628 = vmatpush1.msra.mxu0 0.0
    %629 = vmatprep.subr.mxu0 0.0
    %630 = vmatpush1.msra.mxu0 0.0
    %631 = vmatprep.subr.mxu0 0.0
    %632 = vmatpush1.msra.mxu0 0.0
    %633 = vmatprep.subr.mxu0 0.0
    %634 = vmatpush1.msra.mxu0 0.0
    %635 = vmatprep.subr.mxu0 0.0
    %636 = vmatpush1.msra.mxu0 0.0
    %637 = vmatprep.subr.mxu0 0.0
    %638 = vmatpush1.msra.mxu0 0.0
    %639 = vmatprep.subr.mxu0 0.0
    %640 = vmatpush1.msra.mxu0 0.0
    %641 = vmatprep.subr.mxu0 0.0
    %642 = vmatpush1.msra.mxu0 0.0
    %643 = vmatprep.subr.mxu0 0.0
    %644 = vmatpush1.msra.mxu0 0.0
    %645 = vmatprep.subr.mxu0 0.0
    %646 = vmatpush1.msra.mxu0 0.0
    %647 = vmatprep.subr.mxu0 0.0
    %648 = vmatpush1.msra.mxu0 0.0
    %649 = vmatprep.mubr.f32.mxu0 0.0
    %650 = vmatmul.mubr.f32.gmra.mrb[0].mxu0 %v583
    %v651 = vpop.f32.mrb[0].mxu0
    %v652 = vadd.f32 %v580, %v651
    %v653 = vpop.f32.mrb[0].mxu0
    %654 = vdwg.mxu0
    %s655 = scalar_lea.vmem %s9, 32
    %v656 = vld [vmem:[%s655] sm:$0xff]
    %v657 = vld [vmem:[%s655 + $0x8] sm:$0xff]
    %v658 = vld [vmem:[%s655 + $0x10] sm:$0xff]
    %v659 = vld [vmem:[%s655 + $0x18] sm:$0xff]
    %s660 = scalar_lea.vmem %s10, 1
    %v661 = vld [vmem:[%s660] sm:$0x1]
    %v663 = vlaneseq
    %v664 = vshrl.u32 %v663, 7
    %v665 = vsub.s32 0, %v664
    %v666 = vrot.slane %v661, %v665
    %668 = vmatprep.subr.mxu0 0.0
    %669 = vmatpush1.msra.mxu0 %v656
    %670 = vmatprep.subr.mxu0 0.0
    %671 = vmatpush1.msra.mxu0 %v657
    %672 = vmatprep.subr.mxu0 0.0
    %673 = vmatpush1.msra.mxu0 %v658
    %674 = vmatprep.subr.mxu0 0.0
    %675 = vmatpush1.msra.mxu0 %v659
    %676 = vmatprep.subr.mxu0 0.0
    %677 = vmatpush1.msra.mxu0 0.0
    %678 = vmatprep.subr.mxu0 0.0
    %679 = vmatpush1.msra.mxu0 0.0
    %680 = vmatprep.subr.mxu0 0.0
    %681 = vmatpush1.msra.mxu0 0.0
    %682 = vmatprep.subr.mxu0 0.0
    %683 = vmatpush1.msra.mxu0 0.0
    %684 = vmatprep.subr.mxu0 0.0
    %685 = vmatpush1.msra.mxu0 0.0
    %686 = vmatprep.subr.mxu0 0.0
    %687 = vmatpush1.msra.mxu0 0.0
    %688 = vmatprep.subr.mxu0 0.0
    %689 = vmatpush1.msra.mxu0 0.0
    %690 = vmatprep.subr.mxu0 0.0
    %691 = vmatpush1.msra.mxu0 0.0
    %692 = vmatprep.subr.mxu0 0.0
    %693 = vmatpush1.msra.mxu0 0.0
    %694 = vmatprep.subr.mxu0 0.0
    %695 = vmatpush1.msra.mxu0 0.0
    %696 = vmatprep.subr.mxu0 0.0
    %697 = vmatpush1.msra.mxu0 0.0
    %698 = vmatprep.subr.mxu0 0.0
    %699 = vmatpush1.msra.mxu0 0.0
    %700 = vmatprep.subr.mxu0 0.0
    %701 = vmatpush1.msra.mxu0 0.0
    %702 = vmatprep.subr.mxu0 0.0
    %703 = vmatpush1.msra.mxu0 0.0
    %704 = vmatprep.subr.mxu0 0.0
    %705 = vmatpush1.msra.mxu0 0.0
    %706 = vmatprep.subr.mxu0 0.0
    %707 = vmatpush1.msra.mxu0 0.0
    %708 = vmatprep.subr.mxu0 0.0
    %709 = vmatpush1.msra.mxu0 0.0
    %710 = vmatprep.subr.mxu0 0.0
    %711 = vmatpush1.msra.mxu0 0.0
    %712 = vmatprep.subr.mxu0 0.0
    %713 = vmatpush1.msra.mxu0 0.0
    %714 = vmatprep.subr.mxu0 0.0
    %715 = vmatpush1.msra.mxu0 0.0
    %716 = vmatprep.subr.mxu0 0.0
    %717 = vmatpush1.msra.mxu0 0.0
    %718 = vmatprep.subr.mxu0 0.0
    %719 = vmatpush1.msra.mxu0 0.0
    %720 = vmatprep.subr.mxu0 0.0
    %721 = vmatpush1.msra.mxu0 0.0
    %722 = vmatprep.subr.mxu0 0.0
    %723 = vmatpush1.msra.mxu0 0.0
    %724 = vmatprep.subr.mxu0 0.0
    %725 = vmatpush1.msra.mxu0 0.0
    %726 = vmatprep.subr.mxu0 0.0
    %727 = vmatpush1.msra.mxu0 0.0
    %728 = vmatprep.subr.mxu0 0.0
    %729 = vmatpush1.msra.mxu0 0.0
    %730 = vmatprep.subr.mxu0 0.0
    %731 = vmatpush1.msra.mxu0 0.0
    %732 = vmatprep.mubr.f32.mxu0 0.0
    %733 = vmatmul.mubr.f32.gmra.mrb[0].mxu0 %v583
    %v734 = vpop.f32.mrb[0].mxu0
    %v735 = vadd.f32 %v666, %v734
    %v736 = vpop.f32.mrb[0].mxu0
    %737 = vdwg.mxu0
    %s738 = scalar_lea.vmem %s9, 64
    %v739 = vld [vmem:[%s738] sm:$0xff]
    %v740 = vld [vmem:[%s738 + $0x8] sm:$0xff]
    %v741 = vld [vmem:[%s738 + $0x10] sm:$0xff]
    %v742 = vld [vmem:[%s738 + $0x18] sm:$0xff]
    %s743 = scalar_lea.vmem %s10, 2
    %v744 = vld [vmem:[%s743] sm:$0x1]
    %v746 = vlaneseq
    %v747 = vshrl.u32 %v746, 7
    %v748 = vsub.s32 0, %v747
    %v749 = vrot.slane %v744, %v748
    %751 = vmatprep.subr.mxu0 0.0
    %752 = vmatpush1.msra.mxu0 %v739
    %753 = vmatprep.subr.mxu0 0.0
    %754 = vmatpush1.msra.mxu0 %v740
    %755 = vmatprep.subr.mxu0 0.0
    %756 = vmatpush1.msra.mxu0 %v741
    %757 = vmatprep.subr.mxu0 0.0
    %758 = vmatpush1.msra.mxu0 %v742
    %759 = vmatprep.subr.mxu0 0.0
    %760 = vmatpush1.msra.mxu0 0.0
    %761 = vmatprep.subr.mxu0 0.0
    %762 = vmatpush1.msra.mxu0 0.0
    %763 = vmatprep.subr.mxu0 0.0
    %764 = vmatpush1.msra.mxu0 0.0
    %765 = vmatprep.subr.mxu0 0.0
    %766 = vmatpush1.msra.mxu0 0.0
    %767 = vmatprep.subr.mxu0 0.0
    %768 = vmatpush1.msra.mxu0 0.0
    %769 = vmatprep.subr.mxu0 0.0
    %770 = vmatpush1.msra.mxu0 0.0
    %771 = vmatprep.subr.mxu0 0.0
    %772 = vmatpush1.msra.mxu0 0.0
    %773 = vmatprep.subr.mxu0 0.0
    %774 = vmatpush1.msra.mxu0 0.0
    %775 = vmatprep.subr.mxu0 0.0
    %776 = vmatpush1.msra.mxu0 0.0
    %777 = vmatprep.subr.mxu0 0.0
    %778 = vmatpush1.msra.mxu0 0.0
    %779 = vmatprep.subr.mxu0 0.0
    %780 = vmatpush1.msra.mxu0 0.0
    %781 = vmatprep.subr.mxu0 0.0
    %782 = vmatpush1.msra.mxu0 0.0
    %783 = vmatprep.subr.mxu0 0.0
    %784 = vmatpush1.msra.mxu0 0.0
    %785 = vmatprep.subr.mxu0 0.0
    %786 = vmatpush1.msra.mxu0 0.0
    %787 = vmatprep.subr.mxu0 0.0
    %788 = vmatpush1.msra.mxu0 0.0
    %789 = vmatprep.subr.mxu0 0.0
    %790 = vmatpush1.msra.mxu0 0.0
    %791 = vmatprep.subr.mxu0 0.0
    %792 = vmatpush1.msra.mxu0 0.0
    %793 = vmatprep.subr.mxu0 0.0
    %794 = vmatpush1.msra.mxu0 0.0
    %795 = vmatprep.subr.mxu0 0.0
    %796 = vmatpush1.msra.mxu0 0.0
    %797 = vmatprep.subr.mxu0 0.0
    %798 = vmatpush1.msra.mxu0 0.0
    %799 = vmatprep.subr.mxu0 0.0
    %800 = vmatpush1.msra.mxu0 0.0
    %801 = vmatprep.subr.mxu0 0.0
    %802 = vmatpush1.msra.mxu0 0.0
    %803 = vmatprep.subr.mxu0 0.0
    %804 = vmatpush1.msra.mxu0 0.0
    %805 = vmatprep.subr.mxu0 0.0
    %806 = vmatpush1.msra.mxu0 0.0
    %807 = vmatprep.subr.mxu0 0.0
    %808 = vmatpush1.msra.mxu0 0.0
    %809 = vmatprep.subr.mxu0 0.0
    %810 = vmatpush1.msra.mxu0 0.0
    %811 = vmatprep.subr.mxu0 0.0
    %812 = vmatpush1.msra.mxu0 0.0
    %813 = vmatprep.subr.mxu0 0.0
    %814 = vmatpush1.msra.mxu0 0.0
    %815 = vmatprep.mubr.f32.mxu0 0.0
    %816 = vmatmul.mubr.f32.gmra.mrb[0].mxu0 %v583
    %v817 = vpop.f32.mrb[0].mxu0
    %v818 = vadd.f32 %v749, %v817
    %v819 = vpop.f32.mrb[0].mxu0
    %820 = vdwg.mxu0
    %s821 = scalar_lea.vmem %s9, 96
    %v822 = vld [vmem:[%s821] sm:$0xff]
    %v823 = vld [vmem:[%s821 + $0x8] sm:$0xff]
    %v824 = vld [vmem:[%s821 + $0x10] sm:$0xff]
    %v825 = vld [vmem:[%s821 + $0x18] sm:$0xff]
    %s826 = scalar_lea.vmem %s10, 3
    %v827 = vld [vmem:[%s826] sm:$0x1]
    %v829 = vlaneseq
    %v830 = vshrl.u32 %v829, 7
    %v831 = vsub.s32 0, %v830
    %v832 = vrot.slane %v827, %v831
    %834 = vmatprep.subr.mxu0 0.0
    %835 = vmatpush1.msra.mxu0 %v822
    %836 = vmatprep.subr.mxu0 0.0
    %837 = vmatpush1.msra.mxu0 %v823
    %838 = vmatprep.subr.mxu0 0.0
    %839 = vmatpush1.msra.mxu0 %v824
    %840 = vmatprep.subr.mxu0 0.0
    %841 = vmatpush1.msra.mxu0 %v825
    %842 = vmatprep.subr.mxu0 0.0
    %843 = vmatpush1.msra.mxu0 0.0
    %844 = vmatprep.subr.mxu0 0.0
    %845 = vmatpush1.msra.mxu0 0.0
    %846 = vmatprep.subr.mxu0 0.0
    %847 = vmatpush1.msra.mxu0 0.0
    %848 = vmatprep.subr.mxu0 0.0
    %849 = vmatpush1.msra.mxu0 0.0
    %850 = vmatprep.subr.mxu0 0.0
    %851 = vmatpush1.msra.mxu0 0.0
    %852 = vmatprep.subr.mxu0 0.0
    %853 = vmatpush1.msra.mxu0 0.0
    %854 = vmatprep.subr.mxu0 0.0
    %855 = vmatpush1.msra.mxu0 0.0
    %856 = vmatprep.subr.mxu0 0.0
    %857 = vmatpush1.msra.mxu0 0.0
    %858 = vmatprep.subr.mxu0 0.0
    %859 = vmatpush1.msra.mxu0 0.0
    %860 = vmatprep.subr.mxu0 0.0
    %861 = vmatpush1.msra.mxu0 0.0
    %862 = vmatprep.subr.mxu0 0.0
    %863 = vmatpush1.msra.mxu0 0.0
    %864 = vmatprep.subr.mxu0 0.0
    %865 = vmatpush1.msra.mxu0 0.0
    %866 = vmatprep.subr.mxu0 0.0
    %867 = vmatpush1.msra.mxu0 0.0
    %868 = vmatprep.subr.mxu0 0.0
    %869 = vmatpush1.msra.mxu0 0.0
    %870 = vmatprep.subr.mxu0 0.0
    %871 = vmatpush1.msra.mxu0 0.0
    %872 = vmatprep.subr.mxu0 0.0
    %873 = vmatpush1.msra.mxu0 0.0
    %874 = vmatprep.subr.mxu0 0.0
    %875 = vmatpush1.msra.mxu0 0.0
    %876 = vmatprep.subr.mxu0 0.0
    %877 = vmatpush1.msra.mxu0 0.0
    %878 = vmatprep.subr.mxu0 0.0
    %879 = vmatpush1.msra.mxu0 0.0
    %880 = vmatprep.subr.mxu0 0.0
    %881 = vmatpush1.msra.mxu0 0.0
    %882 = vmatprep.subr.mxu0 0.0
    %883 = vmatpush1.msra.mxu0 0.0
    %884 = vmatprep.subr.mxu0 0.0
    %885 = vmatpush1.msra.mxu0 0.0
    %886 = vmatprep.subr.mxu0 0.0
    %887 = vmatpush1.msra.mxu0 0.0
    %888 = vmatprep.subr.mxu0 0.0
    %889 = vmatpush1.msra.mxu0 0.0
    %890 = vmatprep.subr.mxu0 0.0
    %891 = vmatpush1.msra.mxu0 0.0
    %892 = vmatprep.subr.mxu0 0.0
    %893 = vmatpush1.msra.mxu0 0.0
    %894 = vmatprep.subr.mxu0 0.0
    %895 = vmatpush1.msra.mxu0 0.0
    %896 = vmatprep.subr.mxu0 0.0
    %897 = vmatpush1.msra.mxu0 0.0
    %898 = vmatprep.mubr.f32.mxu0 0.0
    %899 = vmatmul.mubr.f32.gmra.mrb[0].mxu0 %v583
    %v900 = vpop.f32.mrb[0].mxu0
    %v901 = vadd.f32 %v832, %v900
    %v902 = vpop.f32.mrb[0].mxu0
    %903 = vdwg.mxu0
    %v904 = vmul.f32 %v480, 1.442695
    %v905 = vpow.pop %v904
    %v906 = vmul.f32 %v901, 1.442695
    %v907 = vpow.pop %v906
    %v908 = vmul.f32 %v314, 1.442695
    %v909 = vpow.pop %v908
    %v910 = vmul.f32 %v735, 1.442695
    %v911 = vpow.pop %v910
    %v912 = vld [vmem:[%s2] sm:$0xff]
    %v913 = vrsqrt.pop %v905
    %v914 = vmul.f32 %v905, %v913
    %vm915 = vcmp.eq.f32.partialorder %v905, inf
    %v916 = vsel %vm915, %v905, %v914
    %vm917 = vcmp.eq.f32.partialorder %v905, 0.0
    %v918 = vand.u32 %v905, 2147483648
    %v919 = vsel %vm917, %v918, %v916
    %v920 = vmul.f32 %v912, %v919
    %v921 = vadd.f32 %v397, %v920
    %s922 = scalar_lea.vmem %s2, 8
    %v923 = vld [vmem:[%s922] sm:$0xff]
    %v924 = vrsqrt.pop %v907
    %v925 = vmul.f32 %v907, %v924
    %vm926 = vcmp.eq.f32.partialorder %v907, inf
    %v927 = vsel %vm926, %v907, %v925
    %vm928 = vcmp.eq.f32.partialorder %v907, 0.0
    %v929 = vand.u32 %v907, 2147483648
    %v930 = vsel %vm928, %v929, %v927
    %v931 = vmul.f32 %v923, %v930
    %v932 = vadd.f32 %v818, %v931
    %s933 = scalar_lea.vmem %s2, 16
    %v934 = vld [vmem:[%s933] sm:$0xff]
    %v935 = vrsqrt.pop %v909
    %v936 = vmul.f32 %v909, %v935
    %vm937 = vcmp.eq.f32.partialorder %v909, inf
    %v938 = vsel %vm937, %v909, %v936
    %vm939 = vcmp.eq.f32.partialorder %v909, 0.0
    %v940 = vand.u32 %v909, 2147483648
    %v941 = vsel %vm939, %v940, %v938
    %v942 = vmul.f32 %v934, %v941
    %v943 = vadd.f32 %v231, %v942
    %s944 = scalar_lea.vmem %s2, 24
    %v945 = vld [vmem:[%s944] sm:$0xff]
    %v946 = vrsqrt.pop %v911
    %v947 = vmul.f32 %v911, %v946
    %vm948 = vcmp.eq.f32.partialorder %v911, inf
    %v949 = vsel %vm948, %v911, %v947
    %vm950 = vcmp.eq.f32.partialorder %v911, 0.0
    %v951 = vand.u32 %v911, 2147483648
    %v952 = vsel %vm950, %v951, %v949
    %v953 = vmul.f32 %v945, %v952
    %v954 = vadd.f32 %v652, %v953
    %v955 = vrcp.pop %v909
    %v956 = vrcp.pop %v911
    %v957 = vadd.f32 %v955, %v956
    %v958 = vrcp.pop %v957
    %v959 = vlog2.pop %v957
    %v960 = vmul.f32 %v959, 0.6931472
    %v961 = vsub.f32 0.0, %v960
    %v962 = vmul.f32 %v231, %v955
    %v963 = vmul.f32 %v652, %v956
    %v964 = vadd.f32 %v962, %v963
    %v965 = vmul.f32 %v958, %v964
    %s966 = scalar_lea.vmem %s2, 32
    %v967 = vld [vmem:[%s966] sm:$0xff]
    %v968 = vrsqrt.pop %v958
    %v969 = vmul.f32 %v958, %v968
    %vm970 = vcmp.eq.f32.partialorder %v958, inf
    %v971 = vsel %vm970, %v958, %v969
    %vm972 = vcmp.eq.f32.partialorder %v958, 0.0
    %v973 = vand.u32 %v958, 2147483648
    %v974 = vsel %vm972, %v973, %v971
    %v975 = vmul.f32 %v967, %v974
    %v976 = vadd.f32 %v965, %v975
    %v977 = vadd.f32 %v480, 1.0
    %v978 = vmul.f32 %v397, %v397
    %v979 = vsub.f32 %v977, %v978
    %v980 = vsub.f32 %v979, %v905
    %v981 = vadd.f32 %v901, 1.0
    %v982 = vmul.f32 %v818, %v818
    %v983 = vsub.f32 %v981, %v982
    %v984 = vsub.f32 %v983, %v907
    %v985 = vadd.f32 %v980, %v984
    %v986 = vadd.f32 %v961, 1.0
    %v987 = vmul.f32 %v965, %v965
    %v988 = vsub.f32 %v986, %v987
    %v989 = vsub.f32 %v988, %v958
    %v990 = vmul.f32 %v989, 2.0
    %v991 = vadd.f32 %v985, %v990
    %v992 = vsub.f32 %v981, %v978
    %v993 = vsub.f32 %v992, %v907
    %v994 = vsub.f32 %v977, %v982
    %v995 = vsub.f32 %v994, %v905
    %v996 = vadd.f32 %v993, %v995
    %v997 = vadd.f32 %v314, 1.0
    %v998 = vmul.f32 %v231, %v231
    %v999 = vsub.f32 %v997, %v998
    %v1000 = vsub.f32 %v999, %v909
    %v1001 = vadd.f32 %v996, %v1000
    %v1002 = vadd.f32 %v735, 1.0
    %v1003 = vmul.f32 %v652, %v652
    %v1004 = vsub.f32 %v1002, %v1003
    %v1005 = vsub.f32 %v1004, %v911
    %v1006 = vadd.f32 %v1001, %v1005
    %vm1007 = vcmask 64512
    %v1008 = vsel %vm1007, %v991, 0.0
    %1009 = vadd.xlane.f32.xlu0 %v1008
    %v1010 = vpop.xlane.xlu0 %1009
    %v1011 = vrot.slane %v1010, 4
    %v1012 = vadd.f32 %v1010, %v1011
    %v1013 = vrot.slane %v1012, 2
    %v1014 = vadd.f32 %v1012, %v1013
    %v1015 = vrot.slane %v1014, 1
    %v1016 = vadd.f32 %v1014, %v1015
    %s1017 = vtos %v1016
    %s1018 = smul.f32 %s1017, -0.5
    %v1019 = vsel %vm1007, %v1006, 0.0
    %1020 = vadd.xlane.f32.xlu0 %v1019
    %v1021 = vpop.xlane.xlu0 %1020
    %v1022 = vrot.slane %v1021, 4
    %v1023 = vadd.f32 %v1021, %v1022
    %v1024 = vrot.slane %v1023, 2
    %v1025 = vadd.f32 %v1023, %v1024
    %v1026 = vrot.slane %v1025, 1
    %v1027 = vadd.f32 %v1025, %v1026
    %s1028 = vtos %v1027
    %s1029 = smul.f32 %s1028, -0.5
    %v1030 = vld [vmem:[%s11] sm:$0xff]
    %v1031 = vld [vmem:[%s11 + $0x8] sm:$0xff]
    %v1032 = vld [vmem:[%s15] sm:$0xff]
    %v1033 = vld [vmem:[%s15 + $0x8] sm:$0xff]
    %v1035 = vsel %vm1007, %v976, 0
    %v1038 = vsel %vm1007, %v954, 0
    %1040 = vmatprep.subr.mxu0 0.0
    %1041 = vmatpush1.msra.mxu0 %v1031
    %1042 = vmatprep.subr.mxu0 0.0
    %1043 = vmatpush1.msra.mxu0 0.0
    %1044 = vmatprep.subr.mxu0 0.0
    %1045 = vmatpush1.msra.mxu0 0.0
    %1046 = vmatprep.subr.mxu0 0.0
    %1047 = vmatpush1.msra.mxu0 0.0
    %1048 = vmatprep.subr.mxu0 0.0
    %1049 = vmatpush1.msra.mxu0 0.0
    %1050 = vmatprep.subr.mxu0 0.0
    %1051 = vmatpush1.msra.mxu0 0.0
    %1052 = vmatprep.subr.mxu0 0.0
    %1053 = vmatpush1.msra.mxu0 0.0
    %1054 = vmatprep.subr.mxu0 0.0
    %1055 = vmatpush1.msra.mxu0 0.0
    %1056 = vmatprep.subr.mxu0 0.0
    %1057 = vmatpush1.msra.mxu0 0.0
    %1058 = vmatprep.subr.mxu0 0.0
    %1059 = vmatpush1.msra.mxu0 0.0
    %1060 = vmatprep.subr.mxu0 0.0
    %1061 = vmatpush1.msra.mxu0 0.0
    %1062 = vmatprep.subr.mxu0 0.0
    %1063 = vmatpush1.msra.mxu0 0.0
    %1064 = vmatprep.subr.mxu0 0.0
    %1065 = vmatpush1.msra.mxu0 0.0
    %1066 = vmatprep.subr.mxu0 0.0
    %1067 = vmatpush1.msra.mxu0 0.0
    %1068 = vmatprep.subr.mxu0 0.0
    %1069 = vmatpush1.msra.mxu0 0.0
    %1070 = vmatprep.subr.mxu0 0.0
    %1071 = vmatpush1.msra.mxu0 0.0
    %1072 = vmatprep.subr.mxu0 0.0
    %1073 = vmatpush1.msra.mxu0 0.0
    %1074 = vmatprep.subr.mxu0 0.0
    %1075 = vmatpush1.msra.mxu0 0.0
    %1076 = vmatprep.subr.mxu0 0.0
    %1077 = vmatpush1.msra.mxu0 0.0
    %1078 = vmatprep.subr.mxu0 0.0
    %1079 = vmatpush1.msra.mxu0 0.0
    %1080 = vmatprep.subr.mxu0 0.0
    %1081 = vmatpush1.msra.mxu0 0.0
    %1082 = vmatprep.subr.mxu0 0.0
    %1083 = vmatpush1.msra.mxu0 0.0
    %1084 = vmatprep.subr.mxu0 0.0
    %1085 = vmatpush1.msra.mxu0 0.0
    %1086 = vmatprep.subr.mxu0 0.0
    %1087 = vmatpush1.msra.mxu0 0.0
    %1088 = vmatprep.subr.mxu0 0.0
    %1089 = vmatpush1.msra.mxu0 0.0
    %1090 = vmatprep.subr.mxu0 0.0
    %1091 = vmatpush1.msra.mxu0 0.0
    %1092 = vmatprep.subr.mxu0 0.0
    %1093 = vmatpush1.msra.mxu0 0.0
    %1094 = vmatprep.subr.mxu0 0.0
    %1095 = vmatpush1.msra.mxu0 0.0
    %1096 = vmatprep.subr.mxu0 0.0
    %1097 = vmatpush1.msra.mxu0 0.0
    %1098 = vmatprep.subr.mxu0 0.0
    %1099 = vmatpush1.msra.mxu0 0.0
    %1100 = vmatprep.subr.mxu0 0.0
    %1101 = vmatpush1.msra.mxu0 0.0
    %1102 = vmatprep.subr.mxu0 0.0
    %1103 = vmatpush1.msra.mxu0 0.0
    %1104 = vmatprep.mubr.f32.mxu0 0.0
    %1105 = vmatmul.mubr.f32.gmra.mrb[0].mxu0 %v1035
    %v1106 = vpop.f32.mrb[0].mxu0
    %v1107 = vadd.f32 0.0, %v1106
    %v1108 = vpop.f32.mrb[0].mxu0
    %1109 = vmatprep.mubr.f32.mxu0 0.0
    %1110 = vmatmul.mubr.f32.gmra.mrb[0].mxu0 %v1038
    %v1111 = vpop.f32.mrb[0].mxu0
    %v1112 = vadd.f32 0.0, %v1111
    %v1113 = vpop.f32.mrb[0].mxu0
    %1114 = vdwg.mxu0
    %v1116 = vsel %vm1007, %v921, 0
    %1118 = vmatprep.subr.mxu0 0.0
    %1119 = vmatpush1.msra.mxu0 %v1030
    %1120 = vmatprep.subr.mxu0 0.0
    %1121 = vmatpush1.msra.mxu0 0.0
    %1122 = vmatprep.subr.mxu0 0.0
    %1123 = vmatpush1.msra.mxu0 0.0
    %1124 = vmatprep.subr.mxu0 0.0
    %1125 = vmatpush1.msra.mxu0 0.0
    %1126 = vmatprep.subr.mxu0 0.0
    %1127 = vmatpush1.msra.mxu0 0.0
    %1128 = vmatprep.subr.mxu0 0.0
    %1129 = vmatpush1.msra.mxu0 0.0
    %1130 = vmatprep.subr.mxu0 0.0
    %1131 = vmatpush1.msra.mxu0 0.0
    %1132 = vmatprep.subr.mxu0 0.0
    %1133 = vmatpush1.msra.mxu0 0.0
    %1134 = vmatprep.subr.mxu0 0.0
    %1135 = vmatpush1.msra.mxu0 0.0
    %1136 = vmatprep.subr.mxu0 0.0
    %1137 = vmatpush1.msra.mxu0 0.0
    %1138 = vmatprep.subr.mxu0 0.0
    %1139 = vmatpush1.msra.mxu0 0.0
    %1140 = vmatprep.subr.mxu0 0.0
    %1141 = vmatpush1.msra.mxu0 0.0
    %1142 = vmatprep.subr.mxu0 0.0
    %1143 = vmatpush1.msra.mxu0 0.0
    %1144 = vmatprep.subr.mxu0 0.0
    %1145 = vmatpush1.msra.mxu0 0.0
    %1146 = vmatprep.subr.mxu0 0.0
    %1147 = vmatpush1.msra.mxu0 0.0
    %1148 = vmatprep.subr.mxu0 0.0
    %1149 = vmatpush1.msra.mxu0 0.0
    %1150 = vmatprep.subr.mxu0 0.0
    %1151 = vmatpush1.msra.mxu0 0.0
    %1152 = vmatprep.subr.mxu0 0.0
    %1153 = vmatpush1.msra.mxu0 0.0
    %1154 = vmatprep.subr.mxu0 0.0
    %1155 = vmatpush1.msra.mxu0 0.0
    %1156 = vmatprep.subr.mxu0 0.0
    %1157 = vmatpush1.msra.mxu0 0.0
    %1158 = vmatprep.subr.mxu0 0.0
    %1159 = vmatpush1.msra.mxu0 0.0
    %1160 = vmatprep.subr.mxu0 0.0
    %1161 = vmatpush1.msra.mxu0 0.0
    %1162 = vmatprep.subr.mxu0 0.0
    %1163 = vmatpush1.msra.mxu0 0.0
    %1164 = vmatprep.subr.mxu0 0.0
    %1165 = vmatpush1.msra.mxu0 0.0
    %1166 = vmatprep.subr.mxu0 0.0
    %1167 = vmatpush1.msra.mxu0 0.0
    %1168 = vmatprep.subr.mxu0 0.0
    %1169 = vmatpush1.msra.mxu0 0.0
    %1170 = vmatprep.subr.mxu0 0.0
    %1171 = vmatpush1.msra.mxu0 0.0
    %1172 = vmatprep.subr.mxu0 0.0
    %1173 = vmatpush1.msra.mxu0 0.0
    %1174 = vmatprep.subr.mxu0 0.0
    %1175 = vmatpush1.msra.mxu0 0.0
    %1176 = vmatprep.subr.mxu0 0.0
    %1177 = vmatpush1.msra.mxu0 0.0
    %1178 = vmatprep.subr.mxu0 0.0
    %1179 = vmatpush1.msra.mxu0 0.0
    %1180 = vmatprep.subr.mxu0 0.0
    %1181 = vmatpush1.msra.mxu0 0.0
    %1182 = vmatprep.mubr.f32.mxu0 0.0
    %1183 = vmatmul.mubr.f32.gmra.mrb[0].mxu0 %v1116
    %v1184 = vpop.f32.mrb[0].mxu0
    %v1185 = vadd.f32 %v1107, %v1184
    %v1186 = vpop.f32.mrb[0].mxu0
    %1187 = vmatprep.mubr.f32.mxu0 0.0
    %1188 = vmatmul.mubr.f32.gmra.mrb[0].mxu0 %v1116
    %v1189 = vpop.f32.mrb[0].mxu0
    %v1190 = vadd.f32 %v1112, %v1189
    %v1191 = vpop.f32.mrb[0].mxu0
    %1192 = vdwg.mxu0
    %v1193 = vld [vmem:[%s12] sm:$0x1]
    %v1195 = vlaneseq
    %v1196 = vshrl.u32 %v1195, 7
    %v1197 = vsub.s32 0, %v1196
    %v1198 = vrot.slane %v1193, %v1197
    %v1200 = vadd.f32 %v1185, %v1198
    %v1201 = vadd.f32 %v1190, %v1198
    %v1202 = vmax.f32 %v1200, 0.0
    %v1203 = vmax.f32 %v1201, 0.0
    %v1204 = vld [vmem:[%s13] sm:$0xff]
    %v1205 = vld [vmem:[%s13 + $0x8] sm:$0xff]
    %v1206 = vld [vmem:[%s13 + $0x10] sm:$0xff]
    %v1207 = vld [vmem:[%s13 + $0x18] sm:$0xff]
    %v1208 = vld [vmem:[%s14] sm:$0x1]
    %v1210 = vlaneseq
    %v1211 = vshrl.u32 %v1210, 7
    %v1212 = vsub.s32 0, %v1211
    %v1213 = vrot.slane %v1208, %v1212
    %v1216 = vsel %vm160, %v1202, 0
    %v1219 = vsel %vm160, %v1203, 0
    %1221 = vmatprep.subr.mxu0 0.0
    %1222 = vmatpush1.msra.mxu0 %v1204
    %1223 = vmatprep.subr.mxu0 0.0
    %1224 = vmatpush1.msra.mxu0 %v1205
    %1225 = vmatprep.subr.mxu0 0.0
    %1226 = vmatpush1.msra.mxu0 %v1206
    %1227 = vmatprep.subr.mxu0 0.0
    %1228 = vmatpush1.msra.mxu0 %v1207
    %1229 = vmatprep.subr.mxu0 0.0
    %1230 = vmatpush1.msra.mxu0 0.0
    %1231 = vmatprep.subr.mxu0 0.0
    %1232 = vmatpush1.msra.mxu0 0.0
    %1233 = vmatprep.subr.mxu0 0.0
    %1234 = vmatpush1.msra.mxu0 0.0
    %1235 = vmatprep.subr.mxu0 0.0
    %1236 = vmatpush1.msra.mxu0 0.0
    %1237 = vmatprep.subr.mxu0 0.0
    %1238 = vmatpush1.msra.mxu0 0.0
    %1239 = vmatprep.subr.mxu0 0.0
    %1240 = vmatpush1.msra.mxu0 0.0
    %1241 = vmatprep.subr.mxu0 0.0
    %1242 = vmatpush1.msra.mxu0 0.0
    %1243 = vmatprep.subr.mxu0 0.0
    %1244 = vmatpush1.msra.mxu0 0.0
    %1245 = vmatprep.subr.mxu0 0.0
    %1246 = vmatpush1.msra.mxu0 0.0
    %1247 = vmatprep.subr.mxu0 0.0
    %1248 = vmatpush1.msra.mxu0 0.0
    %1249 = vmatprep.subr.mxu0 0.0
    %1250 = vmatpush1.msra.mxu0 0.0
    %1251 = vmatprep.subr.mxu0 0.0
    %1252 = vmatpush1.msra.mxu0 0.0
    %1253 = vmatprep.subr.mxu0 0.0
    %1254 = vmatpush1.msra.mxu0 0.0
    %1255 = vmatprep.subr.mxu0 0.0
    %1256 = vmatpush1.msra.mxu0 0.0
    %1257 = vmatprep.subr.mxu0 0.0
    %1258 = vmatpush1.msra.mxu0 0.0
    %1259 = vmatprep.subr.mxu0 0.0
    %1260 = vmatpush1.msra.mxu0 0.0
    %1261 = vmatprep.subr.mxu0 0.0
    %1262 = vmatpush1.msra.mxu0 0.0
    %1263 = vmatprep.subr.mxu0 0.0
    %1264 = vmatpush1.msra.mxu0 0.0
    %1265 = vmatprep.subr.mxu0 0.0
    %1266 = vmatpush1.msra.mxu0 0.0
    %1267 = vmatprep.subr.mxu0 0.0
    %1268 = vmatpush1.msra.mxu0 0.0
    %1269 = vmatprep.subr.mxu0 0.0
    %1270 = vmatpush1.msra.mxu0 0.0
    %1271 = vmatprep.subr.mxu0 0.0
    %1272 = vmatpush1.msra.mxu0 0.0
    %1273 = vmatprep.subr.mxu0 0.0
    %1274 = vmatpush1.msra.mxu0 0.0
    %1275 = vmatprep.subr.mxu0 0.0
    %1276 = vmatpush1.msra.mxu0 0.0
    %1277 = vmatprep.subr.mxu0 0.0
    %1278 = vmatpush1.msra.mxu0 0.0
    %1279 = vmatprep.subr.mxu0 0.0
    %1280 = vmatpush1.msra.mxu0 0.0
    %1281 = vmatprep.subr.mxu0 0.0
    %1282 = vmatpush1.msra.mxu0 0.0
    %1283 = vmatprep.subr.mxu0 0.0
    %1284 = vmatpush1.msra.mxu0 0.0
    %1285 = vmatprep.mubr.f32.mxu0 0.0
    %1286 = vmatmul.mubr.f32.gmra.mrb[0].mxu0 %v1216
    %v1287 = vpop.f32.mrb[0].mxu0
    %v1288 = vadd.f32 %v1213, %v1287
    %v1289 = vpop.f32.mrb[0].mxu0
    %1290 = vmatprep.mubr.f32.mxu0 0.0
    %1291 = vmatmul.mubr.f32.gmra.mrb[0].mxu0 %v1219
    %v1292 = vpop.f32.mrb[0].mxu0
    %v1293 = vadd.f32 %v1213, %v1292
    %v1294 = vpop.f32.mrb[0].mxu0
    %1295 = vdwg.mxu0
    %v1297 = vsel %vm1007, %v943, 0
    %1299 = vmatprep.subr.mxu0 0.0
    %1300 = vmatpush1.msra.mxu0 %v1033
    %1301 = vmatprep.subr.mxu0 0.0
    %1302 = vmatpush1.msra.mxu0 0.0
    %1303 = vmatprep.subr.mxu0 0.0
    %1304 = vmatpush1.msra.mxu0 0.0
    %1305 = vmatprep.subr.mxu0 0.0
    %1306 = vmatpush1.msra.mxu0 0.0
    %1307 = vmatprep.subr.mxu0 0.0
    %1308 = vmatpush1.msra.mxu0 0.0
    %1309 = vmatprep.subr.mxu0 0.0
    %1310 = vmatpush1.msra.mxu0 0.0
    %1311 = vmatprep.subr.mxu0 0.0
    %1312 = vmatpush1.msra.mxu0 0.0
    %1313 = vmatprep.subr.mxu0 0.0
    %1314 = vmatpush1.msra.mxu0 0.0
    %1315 = vmatprep.subr.mxu0 0.0
    %1316 = vmatpush1.msra.mxu0 0.0
    %1317 = vmatprep.subr.mxu0 0.0
    %1318 = vmatpush1.msra.mxu0 0.0
    %1319 = vmatprep.subr.mxu0 0.0
    %1320 = vmatpush1.msra.mxu0 0.0
    %1321 = vmatprep.subr.mxu0 0.0
    %1322 = vmatpush1.msra.mxu0 0.0
    %1323 = vmatprep.subr.mxu0 0.0
    %1324 = vmatpush1.msra.mxu0 0.0
    %1325 = vmatprep.subr.mxu0 0.0
    %1326 = vmatpush1.msra.mxu0 0.0
    %1327 = vmatprep.subr.mxu0 0.0
    %1328 = vmatpush1.msra.mxu0 0.0
    %1329 = vmatprep.subr.mxu0 0.0
    %1330 = vmatpush1.msra.mxu0 0.0
    %1331 = vmatprep.subr.mxu0 0.0
    %1332 = vmatpush1.msra.mxu0 0.0
    %1333 = vmatprep.subr.mxu0 0.0
    %1334 = vmatpush1.msra.mxu0 0.0
    %1335 = vmatprep.subr.mxu0 0.0
    %1336 = vmatpush1.msra.mxu0 0.0
    %1337 = vmatprep.subr.mxu0 0.0
    %1338 = vmatpush1.msra.mxu0 0.0
    %1339 = vmatprep.subr.mxu0 0.0
    %1340 = vmatpush1.msra.mxu0 0.0
    %1341 = vmatprep.subr.mxu0 0.0
    %1342 = vmatpush1.msra.mxu0 0.0
    %1343 = vmatprep.subr.mxu0 0.0
    %1344 = vmatpush1.msra.mxu0 0.0
    %1345 = vmatprep.subr.mxu0 0.0
    %1346 = vmatpush1.msra.mxu0 0.0
    %1347 = vmatprep.subr.mxu0 0.0
    %1348 = vmatpush1.msra.mxu0 0.0
    %1349 = vmatprep.subr.mxu0 0.0
    %1350 = vmatpush1.msra.mxu0 0.0
    %1351 = vmatprep.subr.mxu0 0.0
    %1352 = vmatpush1.msra.mxu0 0.0
    %1353 = vmatprep.subr.mxu0 0.0
    %1354 = vmatpush1.msra.mxu0 0.0
    %1355 = vmatprep.subr.mxu0 0.0
    %1356 = vmatpush1.msra.mxu0 0.0
    %1357 = vmatprep.subr.mxu0 0.0
    %1358 = vmatpush1.msra.mxu0 0.0
    %1359 = vmatprep.subr.mxu0 0.0
    %1360 = vmatpush1.msra.mxu0 0.0
    %1361 = vmatprep.subr.mxu0 0.0
    %1362 = vmatpush1.msra.mxu0 0.0
    %1363 = vmatprep.mubr.f32.mxu0 0.0
    %1364 = vmatmul.mubr.f32.gmra.mrb[0].mxu0 %v1035
    %v1365 = vpop.f32.mrb[0].mxu0
    %v1366 = vadd.f32 0.0, %v1365
    %v1367 = vpop.f32.mrb[0].mxu0
    %1368 = vmatprep.mubr.f32.mxu0 0.0
    %1369 = vmatmul.mubr.f32.gmra.mrb[0].mxu0 %v1297
    %v1370 = vpop.f32.mrb[0].mxu0
    %v1371 = vadd.f32 0.0, %v1370
    %v1372 = vpop.f32.mrb[0].mxu0
    %1373 = vdwg.mxu0
    %v1375 = vsel %vm1007, %v932, 0
    %1377 = vmatprep.subr.mxu0 0.0
    %1378 = vmatpush1.msra.mxu0 %v1032
    %1379 = vmatprep.subr.mxu0 0.0
    %1380 = vmatpush1.msra.mxu0 0.0
    %1381 = vmatprep.subr.mxu0 0.0
    %1382 = vmatpush1.msra.mxu0 0.0
    %1383 = vmatprep.subr.mxu0 0.0
    %1384 = vmatpush1.msra.mxu0 0.0
    %1385 = vmatprep.subr.mxu0 0.0
    %1386 = vmatpush1.msra.mxu0 0.0
    %1387 = vmatprep.subr.mxu0 0.0
    %1388 = vmatpush1.msra.mxu0 0.0
    %1389 = vmatprep.subr.mxu0 0.0
    %1390 = vmatpush1.msra.mxu0 0.0
    %1391 = vmatprep.subr.mxu0 0.0
    %1392 = vmatpush1.msra.mxu0 0.0
    %1393 = vmatprep.subr.mxu0 0.0
    %1394 = vmatpush1.msra.mxu0 0.0
    %1395 = vmatprep.subr.mxu0 0.0
    %1396 = vmatpush1.msra.mxu0 0.0
    %1397 = vmatprep.subr.mxu0 0.0
    %1398 = vmatpush1.msra.mxu0 0.0
    %1399 = vmatprep.subr.mxu0 0.0
    %1400 = vmatpush1.msra.mxu0 0.0
    %1401 = vmatprep.subr.mxu0 0.0
    %1402 = vmatpush1.msra.mxu0 0.0
    %1403 = vmatprep.subr.mxu0 0.0
    %1404 = vmatpush1.msra.mxu0 0.0
    %1405 = vmatprep.subr.mxu0 0.0
    %1406 = vmatpush1.msra.mxu0 0.0
    %1407 = vmatprep.subr.mxu0 0.0
    %1408 = vmatpush1.msra.mxu0 0.0
    %1409 = vmatprep.subr.mxu0 0.0
    %1410 = vmatpush1.msra.mxu0 0.0
    %1411 = vmatprep.subr.mxu0 0.0
    %1412 = vmatpush1.msra.mxu0 0.0
    %1413 = vmatprep.subr.mxu0 0.0
    %1414 = vmatpush1.msra.mxu0 0.0
    %1415 = vmatprep.subr.mxu0 0.0
    %1416 = vmatpush1.msra.mxu0 0.0
    %1417 = vmatprep.subr.mxu0 0.0
    %1418 = vmatpush1.msra.mxu0 0.0
    %1419 = vmatprep.subr.mxu0 0.0
    %1420 = vmatpush1.msra.mxu0 0.0
    %1421 = vmatprep.subr.mxu0 0.0
    %1422 = vmatpush1.msra.mxu0 0.0
    %1423 = vmatprep.subr.mxu0 0.0
    %1424 = vmatpush1.msra.mxu0 0.0
    %1425 = vmatprep.subr.mxu0 0.0
    %1426 = vmatpush1.msra.mxu0 0.0
    %1427 = vmatprep.subr.mxu0 0.0
    %1428 = vmatpush1.msra.mxu0 0.0
    %1429 = vmatprep.subr.mxu0 0.0
    %1430 = vmatpush1.msra.mxu0 0.0
    %1431 = vmatprep.subr.mxu0 0.0
    %1432 = vmatpush1.msra.mxu0 0.0
    %1433 = vmatprep.subr.mxu0 0.0
    %1434 = vmatpush1.msra.mxu0 0.0
    %1435 = vmatprep.subr.mxu0 0.0
    %1436 = vmatpush1.msra.mxu0 0.0
    %1437 = vmatprep.subr.mxu0 0.0
    %1438 = vmatpush1.msra.mxu0 0.0
    %1439 = vmatprep.subr.mxu0 0.0
    %1440 = vmatpush1.msra.mxu0 0.0
    %1441 = vmatprep.mubr.f32.mxu0 0.0
    %1442 = vmatmul.mubr.f32.gmra.mrb[0].mxu0 %v1375
    %v1443 = vpop.f32.mrb[0].mxu0
    %v1444 = vadd.f32 %v1366, %v1443
    %v1445 = vpop.f32.mrb[0].mxu0
    %1446 = vmatprep.mubr.f32.mxu0 0.0
    %1447 = vmatmul.mubr.f32.gmra.mrb[0].mxu0 %v1375
    %v1448 = vpop.f32.mrb[0].mxu0
    %v1449 = vadd.f32 %v1371, %v1448
    %v1450 = vpop.f32.mrb[0].mxu0
    %1451 = vdwg.mxu0
    %v1452 = vld [vmem:[%s16] sm:$0x1]
    %v1454 = vlaneseq
    %v1455 = vshrl.u32 %v1454, 7
    %v1456 = vsub.s32 0, %v1455
    %v1457 = vrot.slane %v1452, %v1456
    %v1459 = vadd.f32 %v1444, %v1457
    %v1460 = vadd.f32 %v1449, %v1457
    %v1461 = vmax.f32 %v1459, 0.0
    %v1462 = vmax.f32 %v1460, 0.0
    %v1463 = vld [vmem:[%s17] sm:$0xff]
    %v1464 = vld [vmem:[%s17 + $0x8] sm:$0xff]
    %v1465 = vld [vmem:[%s17 + $0x10] sm:$0xff]
    %v1466 = vld [vmem:[%s17 + $0x18] sm:$0xff]
    %v1467 = vld [vmem:[%s18] sm:$0x1]
    %v1469 = vlaneseq
    %v1470 = vshrl.u32 %v1469, 7
    %v1471 = vsub.s32 0, %v1470
    %v1472 = vrot.slane %v1467, %v1471
    %v1475 = vsel %vm160, %v1461, 0
    %v1478 = vsel %vm160, %v1462, 0
    %1480 = vmatprep.subr.mxu0 0.0
    %1481 = vmatpush1.msra.mxu0 %v1463
    %1482 = vmatprep.subr.mxu0 0.0
    %1483 = vmatpush1.msra.mxu0 %v1464
    %1484 = vmatprep.subr.mxu0 0.0
    %1485 = vmatpush1.msra.mxu0 %v1465
    %1486 = vmatprep.subr.mxu0 0.0
    %1487 = vmatpush1.msra.mxu0 %v1466
    %1488 = vmatprep.subr.mxu0 0.0
    %1489 = vmatpush1.msra.mxu0 0.0
    %1490 = vmatprep.subr.mxu0 0.0
    %1491 = vmatpush1.msra.mxu0 0.0
    %1492 = vmatprep.subr.mxu0 0.0
    %1493 = vmatpush1.msra.mxu0 0.0
    %1494 = vmatprep.subr.mxu0 0.0
    %1495 = vmatpush1.msra.mxu0 0.0
    %1496 = vmatprep.subr.mxu0 0.0
    %1497 = vmatpush1.msra.mxu0 0.0
    %1498 = vmatprep.subr.mxu0 0.0
    %1499 = vmatpush1.msra.mxu0 0.0
    %1500 = vmatprep.subr.mxu0 0.0
    %1501 = vmatpush1.msra.mxu0 0.0
    %1502 = vmatprep.subr.mxu0 0.0
    %1503 = vmatpush1.msra.mxu0 0.0
    %1504 = vmatprep.subr.mxu0 0.0
    %1505 = vmatpush1.msra.mxu0 0.0
    %1506 = vmatprep.subr.mxu0 0.0
    %1507 = vmatpush1.msra.mxu0 0.0
    %1508 = vmatprep.subr.mxu0 0.0
    %1509 = vmatpush1.msra.mxu0 0.0
    %1510 = vmatprep.subr.mxu0 0.0
    %1511 = vmatpush1.msra.mxu0 0.0
    %1512 = vmatprep.subr.mxu0 0.0
    %1513 = vmatpush1.msra.mxu0 0.0
    %1514 = vmatprep.subr.mxu0 0.0
    %1515 = vmatpush1.msra.mxu0 0.0
    %1516 = vmatprep.subr.mxu0 0.0
    %1517 = vmatpush1.msra.mxu0 0.0
    %1518 = vmatprep.subr.mxu0 0.0
    %1519 = vmatpush1.msra.mxu0 0.0
    %1520 = vmatprep.subr.mxu0 0.0
    %1521 = vmatpush1.msra.mxu0 0.0
    %1522 = vmatprep.subr.mxu0 0.0
    %1523 = vmatpush1.msra.mxu0 0.0
    %1524 = vmatprep.subr.mxu0 0.0
    %1525 = vmatpush1.msra.mxu0 0.0
    %1526 = vmatprep.subr.mxu0 0.0
    %1527 = vmatpush1.msra.mxu0 0.0
    %1528 = vmatprep.subr.mxu0 0.0
    %1529 = vmatpush1.msra.mxu0 0.0
    %1530 = vmatprep.subr.mxu0 0.0
    %1531 = vmatpush1.msra.mxu0 0.0
    %1532 = vmatprep.subr.mxu0 0.0
    %1533 = vmatpush1.msra.mxu0 0.0
    %1534 = vmatprep.subr.mxu0 0.0
    %1535 = vmatpush1.msra.mxu0 0.0
    %1536 = vmatprep.subr.mxu0 0.0
    %1537 = vmatpush1.msra.mxu0 0.0
    %1538 = vmatprep.subr.mxu0 0.0
    %1539 = vmatpush1.msra.mxu0 0.0
    %1540 = vmatprep.subr.mxu0 0.0
    %1541 = vmatpush1.msra.mxu0 0.0
    %1542 = vmatprep.subr.mxu0 0.0
    %1543 = vmatpush1.msra.mxu0 0.0
    %1544 = vmatprep.mubr.f32.mxu0 0.0
    %1545 = vmatmul.mubr.f32.gmra.mrb[0].mxu0 %v1475
    %v1546 = vpop.f32.mrb[0].mxu0
    %v1547 = vadd.f32 %v1472, %v1546
    %v1548 = vpop.f32.mrb[0].mxu0
    %1549 = vmatprep.mubr.f32.mxu0 0.0
    %1550 = vmatmul.mubr.f32.gmra.mrb[0].mxu0 %v1478
    %v1551 = vpop.f32.mrb[0].mxu0
    %v1552 = vadd.f32 %v1472, %v1551
    %v1553 = vpop.f32.mrb[0].mxu0
    %1554 = vdwg.mxu0
    %v1555 = vsub.f32 %v1288, %v63
    %v1556 = vsub.f32 %v1293, %v63
    %v1557 = vsub.f32 %v1547, %v64
    %v1558 = vsub.f32 %v1552, %v64
    %v1559 = vmul.f32 %v1555, %v1555
    %v1560 = vmul.f32 %v1556, %v1556
    %v1561 = vmul.f32 %v1557, %v1557
    %v1562 = vmul.f32 %v1558, %v1558
    %v1563 = vsel %vm74, %v1559, 0.0
    %1564 = vadd.xlane.f32.xlu0 %v1563
    %v1565 = vpop.xlane.xlu0 %1564
    %v1566 = vrot.slane %v1565, 4
    %v1567 = vadd.f32 %v1565, %v1566
    %v1568 = vrot.slane %v1567, 2
    %v1569 = vadd.f32 %v1567, %v1568
    %v1570 = vrot.slane %v1569, 1
    %v1571 = vadd.f32 %v1569, %v1570
    %s1572 = vtos %v1571
    %s1573 = smul.f32 %s1572, 0.0078125
    %v1574 = vsel %vm492, %v1561, 0.0
    %1575 = vadd.xlane.f32.xlu0 %v1574
    %v1576 = vpop.xlane.xlu0 %1575
    %v1577 = vrot.slane %v1576, 4
    %v1578 = vadd.f32 %v1576, %v1577
    %v1579 = vrot.slane %v1578, 2
    %v1580 = vadd.f32 %v1578, %v1579
    %v1581 = vrot.slane %v1580, 1
    %v1582 = vadd.f32 %v1580, %v1581
    %s1583 = vtos %v1582
    %s1584 = smul.f32 %s1583, 0.010416667
    %s1585 = sadd.f32 %s1573, %s1584
    %v1586 = vsel %vm74, %v1560, 0.0
    %1587 = vadd.xlane.f32.xlu0 %v1586
    %v1588 = vpop.xlane.xlu0 %1587
    %v1589 = vrot.slane %v1588, 4
    %v1590 = vadd.f32 %v1588, %v1589
    %v1591 = vrot.slane %v1590, 2
    %v1592 = vadd.f32 %v1590, %v1591
    %v1593 = vrot.slane %v1592, 1
    %v1594 = vadd.f32 %v1592, %v1593
    %s1595 = vtos %v1594
    %s1596 = smul.f32 %s1595, 0.0078125
    %v1597 = vsel %vm492, %v1562, 0.0
    %1598 = vadd.xlane.f32.xlu0 %v1597
    %v1599 = vpop.xlane.xlu0 %1598
    %v1600 = vrot.slane %v1599, 4
    %v1601 = vadd.f32 %v1599, %v1600
    %v1602 = vrot.slane %v1601, 2
    %v1603 = vadd.f32 %v1601, %v1602
    %v1604 = vrot.slane %v1603, 1
    %v1605 = vadd.f32 %v1603, %v1604
    %s1606 = vtos %v1605
    %s1607 = smul.f32 %s1606, 0.010416667
    %s1608 = sadd.f32 %s1596, %s1607
    %s1609 = sadd.f32 %s1585, %s1018
    %s1610 = sadd.f32 %s1609, %s1608
    %s1611 = sadd.f32 %s1610, %s1029
    %s1612 = scalar_lea.smem [#allocation2], 0
    %1613 = sst [smem:[%s1612]] %s1611
    %s1614 = scalar_lea.smem [#allocation2], 1
    %1615 = sst [smem:[%s1614]] %s1585
    %s1616 = scalar_lea.smem [#allocation2], 2
    %1617 = sst [smem:[%s1616]] %s1018
    %s1618 = scalar_lea.smem [#allocation2], 3
    %1619 = sst [smem:[%s1618]] %s1608
    %s1620 = scalar_lea.smem [#allocation2], 4
    %1621 = sst [smem:[%s1620]] %s1029
    // Predicated region
    $region78: #{tpu_custom_call.1} parent=1 // pred_check
      _
    $region79: #{tpu_custom_call.1} parent=1 // pred_check_branch
      %1623 = sbr.rel (0) target = $region81
    $region80: #{tpu_custom_call.1} parent=1 // pred_region
      %s1625 = ssub.s32 16, 16
      %1626 = vsyncadd [#allocation3], %s1625
      %1629 = dma.smem_to_hbm [#allocation2], 16, %s19, [#allocation3]
    $region81: #{tpu_custom_call.1} parent=1 // pred_fallthru
      _
    // Predicated region
    $region82: #{tpu_custom_call.1} parent=1 // pred_check
      _
    $region83: #{tpu_custom_call.1} parent=1 // pred_check_branch
      %1631 = sbr.rel (0) target = $region85
    $region84: #{tpu_custom_call.1} parent=1 // pred_region
      %1632 = dma.done [#allocation3], 16
    $region85: #{tpu_custom_call.1} parent=1 // pred_fallthru
      _
    %1633 = sfence
    %1634 = vsyncpa [#allocation3], 1

</llo_original>
